<compile_context>
chip_gen: v7x
topology: tpu7x:2x2x1
jax: 0.10.0
libtpu: 0.0.40
codegen_flags: <defaults>
</compile_context>

<pallas_src>
import functools
import math

import jax
import jax.numpy as jnp
from jax import lax
from jax.experimental import pallas as pl
from jax.experimental.pallas import tpu as pltpu


def _be_attn_kernel(q_ref, kv_ref,
                    wq_ref, wk_ref, wv_ref, wout_ref,
                    bias_ref, be_ref,
                    out_ref, attn_ref,
                    ctx_scr,
                    *, num_heads, head_dim, mm_dtype):
    # One grid step = one batch element b.  Block shapes:
    #   q_ref   (1, Tq, H)        kv_ref (1, Tk, H)
    #   wq/wk/wv/wout (H, H)      grid-resident (constant index_map)
    #   bias_ref (4, H)  rows = (b_q*scale, b_k, b_v, b_out)   resident
    #   be_ref   (1, 5, H) rows = (r_q, r_kv, s_q*scale, s_k, s_v)
    #   out_ref  (1, Tq, H)       attn_ref (1, heads, Tq, Tk)
    #   ctx_scr  (Tq, H) f32 scratch holding the concatenated head contexts
    bias = bias_ref[...]                               # [4, H]  f32
    b_q, b_k, b_v, b_o = bias[0:1], bias[1:2], bias[2:3], bias[3:4]
    be = be_ref[0]                                     # [5, H]  f32
    r_q, r_kv = be[0:1], be[1:2]
    s_q, s_k, s_v = be[2:3], be[3:4], be[4:5]

    # ---- batch-ensemble input scaling (f32 VPU) + bf16 cast for the MXU ----
    q_r = (q_ref[0] * r_q).astype(mm_dtype)            # [Tq, H]
    kv_r = (kv_ref[0] * r_kv).astype(mm_dtype)         # [Tk, H]

    # ---- full-width projections: [T, H] @ [H, H], f32 accumulation ---------
    # Weights are pre-transposed / de-interleaved host-side; s_q and b_q carry
    # the attention scale, so q_p comes out pre-scaled.
    q_p = jnp.dot(q_r, wq_ref[...],
                  preferred_element_type=jnp.float32) * s_q + b_q   # [Tq, H]
    k_p = jnp.dot(kv_r, wk_ref[...],
                  preferred_element_type=jnp.float32) * s_k + b_k   # [Tk, H]
    v_p = jnp.dot(kv_r, wv_ref[...],
                  preferred_element_type=jnp.float32) * s_v + b_v   # [Tk, H]

    # ---- per-head scaled dot-product attention (static unrolled loop) ------
    for h in range(num_heads):
        sl = slice(h * head_dim, (h + 1) * head_dim)
        q_h = q_p[:, sl].astype(mm_dtype)               # [Tq, d]
        k_h = k_p[:, sl].astype(mm_dtype)               # [Tk, d]
        v_h = v_p[:, sl].astype(mm_dtype)               # [Tk, d]
        # q_h @ k_h^T without an in-kernel transpose.
        s = lax.dot_general(q_h, k_h, (((1,), (1,)), ((), ())),
                            preferred_element_type=jnp.float32)     # [Tq, Tk]
        s = s - jnp.max(s, axis=-1, keepdims=True)
        p = jnp.exp(s)
        probs = p / jnp.sum(p, axis=-1, keepdims=True)  # exact normalization
        attn_ref[0, h] = probs.astype(attn_ref.dtype)   # coverage tile
        ctx_scr[:, sl] = jnp.dot(probs.astype(mm_dtype), v_h,
                                 preferred_element_type=jnp.float32)

    # ---- single full-contraction output projection: [Tq, H] @ [H, H] -------
    out = jnp.dot(ctx_scr[...].astype(mm_dtype), wout_ref[...],
                  preferred_element_type=jnp.float32) + b_o
    out_ref[0] = out.astype(out_ref.dtype)


def be_encdec_attention(query, key, params, num_heads, *,
                        mm_dtype=jnp.bfloat16, coverage_dtype=None):
    """Forward pass of BEEncdecMultiheadAttn (training mode, dropout=0, no mask).

    query: [Tq, B, H], key: [Tk, B, H]  (PyTorch time-first layout).
    Returns (outputs [Tq, B, H], coverage [B*heads, Tq, Tk]).
    """
    Tq, B, H = query.shape
    Tk = key.shape[0]
    assert H % num_heads == 0
    d = H // num_heads
    scale = d ** (-0.5)
    E = params["r_q"].shape[0]
    cov_dtype = coverage_dtype if coverage_dtype is not None else query.dtype

    # training-mode ensemble index selection (indices = arange(B) % ensemble)
    idx = jnp.arange(B) % E

    # ---- pack the per-batch batch-ensemble vectors into one [B, 5, H] block.
    # s_kv is interleaved per head as (k, v); de-interleave into s_k / s_v so
    # the kernel's K/V projections produce head-contiguous [.., heads*d].
    r_q = params["r_q"][idx]                                        # [B, H]
    r_kv = params["r_kv"][idx]                                      # [B, H]
    s_q = params["s_q"][idx] * scale                                # [B, H]
    s_kv4 = params["s_kv"][idx].reshape(B, num_heads, 2, d)
    s_k = s_kv4[:, :, 0].reshape(B, H)
    s_v = s_kv4[:, :, 1].reshape(B, H)
    be_pack = jnp.stack([r_q, r_kv, s_q, s_k, s_v],
                        axis=1).astype(jnp.float32)                 # [B, 5, H]

    # ---- pack the biases into one resident [4, H] block ---------------------
    bkv3 = params["bkv"].reshape(num_heads, 2, d)
    bias_pack = jnp.stack([
        params["bq"] * scale,                    # attention scale folded in
        bkv3[:, 0].reshape(H),
        bkv3[:, 1].reshape(H),
        params["bout"],
    ], axis=0).astype(jnp.float32)                                  # [4, H]

    # ---- pre-transpose weights, de-interleave the fused KV weight, bf16 ----
    wq_t = params["wq"].T.astype(mm_dtype)                          # [H, H]
    wkv4 = params["wkv"].reshape(num_heads, 2, d, H)  # rows (h, k/v, j), cols i
    wk_t = wkv4[:, 0].transpose(2, 0, 1).reshape(H, H).astype(mm_dtype)
    wv_t = wkv4[:, 1].transpose(2, 0, 1).reshape(H, H).astype(mm_dtype)
    wout_t = params["wout"].T.astype(mm_dtype)                      # [H, H]

    # Activations: go batch-major for the kernel, back to time-first after.
    q_b = jnp.transpose(query, (1, 0, 2))     # [B, Tq, H]
    kv_b = jnp.transpose(key, (1, 0, 2))      # [B, Tk, H]

    kernel = functools.partial(_be_attn_kernel, num_heads=num_heads,
                               head_dim=d, mm_dtype=mm_dtype)

    in_specs = [
        pl.BlockSpec((1, Tq, H), lambda b: (b, 0, 0)),        # q (per batch)
        pl.BlockSpec((1, Tk, H), lambda b: (b, 0, 0)),        # kv (per batch)
        pl.BlockSpec((H, H), lambda b: (0, 0)),               # W_q^T   resident
        pl.BlockSpec((H, H), lambda b: (0, 0)),               # W_k^T   resident
        pl.BlockSpec((H, H), lambda b: (0, 0)),               # W_v^T   resident
        pl.BlockSpec((H, H), lambda b: (0, 0)),               # W_out^T resident
        pl.BlockSpec((4, H), lambda b: (0, 0)),               # bias pack
        pl.BlockSpec((1, 5, H), lambda b: (b, 0, 0)),         # BE pack
    ]
    out_specs = [
        pl.BlockSpec((1, Tq, H), lambda b: (b, 0, 0)),        # output
        pl.BlockSpec((1, num_heads, Tq, Tk), lambda b: (b, 0, 0, 0)),  # coverage
    ]

    out_b, attn = pl.pallas_call(
        kernel,
        out_shape=(
            jax.ShapeDtypeStruct((B, Tq, H), query.dtype),
            jax.ShapeDtypeStruct((B, num_heads, Tq, Tk), cov_dtype),
        ),
        grid_spec=pltpu.PrefetchScalarGridSpec(
            num_scalar_prefetch=0,
            grid=(B,),
            in_specs=in_specs,
            out_specs=out_specs,
            scratch_shapes=[
                pltpu.VMEM((Tq, H), jnp.float32),   # concatenated head contexts
            ],
        ),
        compiler_params=pltpu.CompilerParams(
            dimension_semantics=("parallel",)),
    )(q_b, kv_b, wq_t, wk_t, wv_t, wout_t, bias_pack, be_pack)

    outputs = jnp.transpose(out_b, (1, 0, 2))                  # [Tq, B, H]
    coverage = attn.reshape(B * num_heads, Tq, Tk)             # [B*heads, Tq, Tk]
    return outputs, coverage


def _reference_forward(query, key, params, num_heads):
    """Pure-JAX f32 reference mirroring the PyTorch forward (training mode)."""
    Tq, B, H = query.shape
    Tk = key.shape[0]
    d = H // num_heads
    E = params["r_q"].shape[0]
    idx = jnp.arange(B) % E
    r_q, s_q = params["r_q"][idx], params["s_q"][idx]
    r_kv, s_kv = params["r_kv"][idx], params["s_kv"][idx]

    q_r = query * r_q[None]
    q_mm = jnp.einsum("tbh,oh->tbo", q_r, params["wq"])
    q = q_mm * s_q[None] + params["bq"]

    kv_r = key * r_kv[None]
    kv_mm = jnp.einsum("tbh,oh->tbo", kv_r, params["wkv"])
    kv = kv_mm * s_kv[None] + params["bkv"]

    queries = q.reshape(Tq, B * num_heads, d)
    kvr = kv.reshape(Tk, B * num_heads, 2, d)
    keys, values = kvr[:, :, 0], kvr[:, :, 1]

    scores = jnp.einsum("qnd,knd->nqk", queries, keys) * (d ** -0.5)
    sm = jax.nn.softmax(scores.astype(jnp.float32), axis=-1).astype(query.dtype)
    ctx = jnp.einsum("nqk,knd->qnd", sm, values).reshape(Tq, B, H)
    out = jnp.einsum("tbh,oh->tbo", ctx, params["wout"]) + params["bout"]
    return out, sm


def init_params(key, embed_dim, ensemble):
    std = math.sqrt(2.0 / (embed_dim + embed_dim))
    ks = jax.random.split(key, 7)
    sign = lambda k, shape: 1.0 - 2.0 * jax.random.bernoulli(
        k, 0.5, shape).astype(jnp.float32)
    return {
        "wq": std * jax.random.normal(ks[0], (embed_dim, embed_dim), jnp.float32),
        "wkv": std * jax.random.normal(ks[1], (2 * embed_dim, embed_dim), jnp.float32),
        "wout": std * jax.random.normal(ks[2], (embed_dim, embed_dim), jnp.float32),
        "bq": jnp.zeros((embed_dim,), jnp.float32),
        "bkv": jnp.zeros((2 * embed_dim,), jnp.float32),
        "bout": jnp.zeros((embed_dim,), jnp.float32),
        "r_q": sign(ks[3], (ensemble, embed_dim)),
        "s_q": sign(ks[4], (ensemble, embed_dim)),
        "r_kv": sign(ks[5], (ensemble, embed_dim)),
        "s_kv": sign(ks[6], (ensemble, 2 * embed_dim)),
    }


if __name__ == "__main__":
    # small shapes consistent with the module's forward
    num_heads = 4
    embed_dim = 32          # H, head_dim = 8
    ensemble = 2
    Tq, Tk, B = 8, 8, 2

    root = jax.random.PRNGKey(0)
    k_p, k_q, k_k = jax.random.split(root, 3)
    params = init_params(k_p, embed_dim, ensemble)

    query = jax.random.normal(k_q, (Tq, B, embed_dim), jnp.float32)
    key = jax.random.normal(k_k, (Tk, B, embed_dim), jnp.float32)
    # value is key (module asserts `value is key`)

    # TODO(synk): attn_mask / incremental decoding cache / attn_drop>0 dropout
    # and the eval-mode ensemble-averaging branch are not implemented; the
    # kernel covers training mode with attn_mask=None and attn_drop=0.0.

    outputs, coverage = be_encdec_attention(query, key, params, num_heads)
    jax.block_until_ready((outputs, coverage))

    ref_out, ref_cov = _reference_forward(query, key, params, num_heads)
    # Tolerance is loose because the kernel runs the MXU in bf16 (f32 accum)
    # while the reference is pure f32.
    assert jnp.allclose(outputs, ref_out, rtol=5e-2, atol=5e-2), "output mismatch"
    assert jnp.allclose(coverage, ref_cov, rtol=5e-2, atol=5e-2), "coverage mismatch"

    print("KERNEL_OK")
</pallas_src>

<mosaic_0001>
module attributes {stable_mosaic.version = 11 : i64} {
  func.func @_be_attn_kernel(%arg0: i32, %arg1: memref<1x8x32xf32, #tpu.memory_space<vmem>>, %arg2: memref<1x8x32xf32, #tpu.memory_space<vmem>>, %arg3: memref<32x32xbf16, #tpu.memory_space<vmem>>, %arg4: memref<32x32xbf16, #tpu.memory_space<vmem>>, %arg5: memref<32x32xbf16, #tpu.memory_space<vmem>>, %arg6: memref<32x32xbf16, #tpu.memory_space<vmem>>, %arg7: memref<4x32xf32, #tpu.memory_space<vmem>>, %arg8: memref<1x5x32xf32, #tpu.memory_space<vmem>>, %arg9: memref<1x8x32xf32, #tpu.memory_space<vmem>>, %arg10: memref<1x4x8x8xf32, #tpu.memory_space<vmem>>, %arg11: memref<8x32xf32, #tpu.memory_space<vmem>>) attributes {dimension_semantics = [#tpu.dimension_semantics<parallel>], iteration_bounds = array<i64: 2>, scalar_prefetch = 0 : i64, scratch_operands = 1 : i64, tpu.core_type = #tpu.core_type<tc>, window_params = [{transform_indices = @transform_0, window_bounds = array<i64: 1, 8, 32>}, {transform_indices = @transform_1, window_bounds = array<i64: 1, 8, 32>}, {pipeline_mode = #tpu.pipeline_mode<synchronous>, transform_indices = @transform_2, window_bounds = array<i64: 32, 32>}, {pipeline_mode = #tpu.pipeline_mode<synchronous>, transform_indices = @transform_3, window_bounds = array<i64: 32, 32>}, {pipeline_mode = #tpu.pipeline_mode<synchronous>, transform_indices = @transform_4, window_bounds = array<i64: 32, 32>}, {pipeline_mode = #tpu.pipeline_mode<synchronous>, transform_indices = @transform_5, window_bounds = array<i64: 32, 32>}, {pipeline_mode = #tpu.pipeline_mode<synchronous>, transform_indices = @transform_6, window_bounds = array<i64: 4, 32>}, {transform_indices = @transform_7, window_bounds = array<i64: 1, 5, 32>}, {transform_indices = @transform_8, window_bounds = array<i64: 1, 8, 32>}, {transform_indices = @transform_9, window_bounds = array<i64: 1, 4, 8, 8>}]} {
    %c0 = arith.constant 0 : index
    %c0_0 = arith.constant 0 : index
    %0 = vector.load %arg7[%c0, %c0_0] : memref<4x32xf32, #tpu.memory_space<vmem>>, vector<4x32xf32>
    %1 = vector.extract_strided_slice %0 {offsets = [0, 0], sizes = [1, 32], strides = [1, 1]} : vector<4x32xf32> to vector<1x32xf32>
    %2 = vector.extract_strided_slice %0 {offsets = [1, 0], sizes = [1, 32], strides = [1, 1]} : vector<4x32xf32> to vector<1x32xf32>
    %3 = vector.extract_strided_slice %0 {offsets = [2, 0], sizes = [1, 32], strides = [1, 1]} : vector<4x32xf32> to vector<1x32xf32>
    %4 = vector.extract_strided_slice %0 {offsets = [3, 0], sizes = [1, 32], strides = [1, 1]} : vector<4x32xf32> to vector<1x32xf32>
    %c0_1 = arith.constant 0 : index
    %c0_2 = arith.constant 0 : index
    %c0_3 = arith.constant 0 : index
    %5 = vector.load %arg8[%c0_1, %c0_2, %c0_3] : memref<1x5x32xf32, #tpu.memory_space<vmem>>, vector<1x5x32xf32>
    %6 = vector.shape_cast %5 : vector<1x5x32xf32> to vector<5x32xf32>
    %7 = vector.extract_strided_slice %6 {offsets = [0, 0], sizes = [1, 32], strides = [1, 1]} : vector<5x32xf32> to vector<1x32xf32>
    %8 = vector.extract_strided_slice %6 {offsets = [1, 0], sizes = [1, 32], strides = [1, 1]} : vector<5x32xf32> to vector<1x32xf32>
    %9 = vector.extract_strided_slice %6 {offsets = [2, 0], sizes = [1, 32], strides = [1, 1]} : vector<5x32xf32> to vector<1x32xf32>
    %10 = vector.extract_strided_slice %6 {offsets = [3, 0], sizes = [1, 32], strides = [1, 1]} : vector<5x32xf32> to vector<1x32xf32>
    %11 = vector.extract_strided_slice %6 {offsets = [4, 0], sizes = [1, 32], strides = [1, 1]} : vector<5x32xf32> to vector<1x32xf32>
    %c0_4 = arith.constant 0 : index
    %c0_5 = arith.constant 0 : index
    %c0_6 = arith.constant 0 : index
    %12 = vector.load %arg1[%c0_4, %c0_5, %c0_6] : memref<1x8x32xf32, #tpu.memory_space<vmem>>, vector<1x8x32xf32>
    %13 = vector.shape_cast %12 : vector<1x8x32xf32> to vector<8x32xf32>
    %14 = vector.broadcast %7 : vector<1x32xf32> to vector<8x32xf32>
    %15 = arith.mulf %13, %14 : vector<8x32xf32>
    %16 = arith.truncf %15 : vector<8x32xf32> to vector<8x32xbf16>
    %c0_7 = arith.constant 0 : index
    %c0_8 = arith.constant 0 : index
    %c0_9 = arith.constant 0 : index
    %17 = vector.load %arg2[%c0_7, %c0_8, %c0_9] : memref<1x8x32xf32, #tpu.memory_space<vmem>>, vector<1x8x32xf32>
    %18 = vector.shape_cast %17 : vector<1x8x32xf32> to vector<8x32xf32>
    %19 = vector.broadcast %8 : vector<1x32xf32> to vector<8x32xf32>
    %20 = arith.mulf %18, %19 : vector<8x32xf32>
    %21 = arith.truncf %20 : vector<8x32xf32> to vector<8x32xbf16>
    %c0_10 = arith.constant 0 : index
    %c0_11 = arith.constant 0 : index
    %22 = vector.load %arg3[%c0_10, %c0_11] : memref<32x32xbf16, #tpu.memory_space<vmem>>, vector<32x32xbf16>
    %cst = arith.constant dense<0.000000e+00> : vector<8x32xf32>
    %23 = tpu.matmul %16, %22, %cst {dimension_numbers = #tpu.dot_dimension_numbers<[1], [0], [0], [1], [0, 0, 1, 1], [], []>} : vector<8x32xbf16>, vector<32x32xbf16>, vector<8x32xf32> -> vector<8x32xf32>
    %24 = vector.broadcast %9 : vector<1x32xf32> to vector<8x32xf32>
    %25 = arith.mulf %23, %24 : vector<8x32xf32>
    %26 = vector.broadcast %1 : vector<1x32xf32> to vector<8x32xf32>
    %27 = arith.addf %25, %26 : vector<8x32xf32>
    %c0_12 = arith.constant 0 : index
    %c0_13 = arith.constant 0 : index
    %28 = vector.load %arg4[%c0_12, %c0_13] : memref<32x32xbf16, #tpu.memory_space<vmem>>, vector<32x32xbf16>
    %cst_14 = arith.constant dense<0.000000e+00> : vector<8x32xf32>
    %29 = tpu.matmul %21, %28, %cst_14 {dimension_numbers = #tpu.dot_dimension_numbers<[1], [0], [0], [1], [0, 0, 1, 1], [], []>} : vector<8x32xbf16>, vector<32x32xbf16>, vector<8x32xf32> -> vector<8x32xf32>
    %30 = vector.broadcast %10 : vector<1x32xf32> to vector<8x32xf32>
    %31 = arith.mulf %29, %30 : vector<8x32xf32>
    %32 = vector.broadcast %2 : vector<1x32xf32> to vector<8x32xf32>
    %33 = arith.addf %31, %32 : vector<8x32xf32>
    %c0_15 = arith.constant 0 : index
    %c0_16 = arith.constant 0 : index
    %34 = vector.load %arg5[%c0_15, %c0_16] : memref<32x32xbf16, #tpu.memory_space<vmem>>, vector<32x32xbf16>
    %cst_17 = arith.constant dense<0.000000e+00> : vector<8x32xf32>
    %35 = tpu.matmul %21, %34, %cst_17 {dimension_numbers = #tpu.dot_dimension_numbers<[1], [0], [0], [1], [0, 0, 1, 1], [], []>} : vector<8x32xbf16>, vector<32x32xbf16>, vector<8x32xf32> -> vector<8x32xf32>
    %36 = vector.broadcast %11 : vector<1x32xf32> to vector<8x32xf32>
    %37 = arith.mulf %35, %36 : vector<8x32xf32>
    %38 = vector.broadcast %3 : vector<1x32xf32> to vector<8x32xf32>
    %39 = arith.addf %37, %38 : vector<8x32xf32>
    %40 = vector.extract_strided_slice %27 {offsets = [0, 0], sizes = [8, 8], strides = [1, 1]} : vector<8x32xf32> to vector<8x8xf32>
    %41 = arith.truncf %40 : vector<8x8xf32> to vector<8x8xbf16>
    %42 = vector.extract_strided_slice %33 {offsets = [0, 0], sizes = [8, 8], strides = [1, 1]} : vector<8x32xf32> to vector<8x8xf32>
    %43 = arith.truncf %42 : vector<8x8xf32> to vector<8x8xbf16>
    %44 = vector.extract_strided_slice %39 {offsets = [0, 0], sizes = [8, 8], strides = [1, 1]} : vector<8x32xf32> to vector<8x8xf32>
    %45 = arith.truncf %44 : vector<8x8xf32> to vector<8x8xbf16>
    %cst_18 = arith.constant dense<0.000000e+00> : vector<8x8xf32>
    %46 = tpu.matmul %41, %43, %cst_18 {dimension_numbers = #tpu.dot_dimension_numbers<[1], [1], [0], [0], [0, 0, 1, 0], [], []>} : vector<8x8xbf16>, vector<8x8xbf16>, vector<8x8xf32> -> vector<8x8xf32>
    %cst_19 = arith.constant dense<0xFF800000> : vector<8xf32>
    %47 = vector.multi_reduction <maximumf>, %46, %cst_19 [1] : vector<8x8xf32> to vector<8xf32>
    %48 = vector.shape_cast %47 : vector<8xf32> to vector<8x1xf32>
    %49 = vector.broadcast %48 : vector<8x1xf32> to vector<8x8xf32>
    %50 = arith.subf %46, %49 : vector<8x8xf32>
    %51 = math.exp %50 : vector<8x8xf32>
    %cst_20 = arith.constant dense<0.000000e+00> : vector<8xf32>
    %52 = vector.multi_reduction <add>, %51, %cst_20 [1] : vector<8x8xf32> to vector<8xf32>
    %53 = vector.shape_cast %52 : vector<8xf32> to vector<8x1xf32>
    %54 = vector.broadcast %53 : vector<8x1xf32> to vector<8x8xf32>
    %55 = arith.divf %51, %54 : vector<8x8xf32>
    %c0_21 = arith.constant 0 : index
    %c0_22 = arith.constant 0 : index
    %c0_23 = arith.constant 0 : index
    %c0_24 = arith.constant 0 : index
    %56 = vector.load %arg10[%c0_21, %c0_22, %c0_23, %c0_24] : memref<1x4x8x8xf32, #tpu.memory_space<vmem>>, vector<1x1x8x8xf32>
    %57 = vector.shape_cast %56 : vector<1x1x8x8xf32> to vector<8x8xf32>
    %58 = vector.shape_cast %55 : vector<8x8xf32> to vector<1x1x8x8xf32>
    tpu.vector_store %arg10[%c0_21, %c0_22, %c0_23, %c0_24], %58 {strides = array<i32>} : memref<1x4x8x8xf32, #tpu.memory_space<vmem>>, vector<1x1x8x8xf32>,
    %59 = arith.truncf %55 : vector<8x8xf32> to vector<8x8xbf16>
    %cst_25 = arith.constant dense<0.000000e+00> : vector<8x8xf32>
    %60 = tpu.matmul %59, %45, %cst_25 {dimension_numbers = #tpu.dot_dimension_numbers<[1], [0], [0], [1], [0, 0, 1, 1], [], []>} : vector<8x8xbf16>, vector<8x8xbf16>, vector<8x8xf32> -> vector<8x8xf32>
    %c0_26 = arith.constant 0 : index
    %c0_27 = arith.constant 0 : index
    %61 = vector.load %arg11[%c0_26, %c0_27] : memref<8x32xf32, #tpu.memory_space<vmem>>, vector<8x8xf32>
    tpu.vector_store %arg11[%c0_26, %c0_27], %60 {strides = array<i32>} : memref<8x32xf32, #tpu.memory_space<vmem>>, vector<8x8xf32>,
    %62 = vector.extract_strided_slice %27 {offsets = [0, 8], sizes = [8, 8], strides = [1, 1]} : vector<8x32xf32> to vector<8x8xf32>
    %63 = arith.truncf %62 : vector<8x8xf32> to vector<8x8xbf16>
    %64 = vector.extract_strided_slice %33 {offsets = [0, 8], sizes = [8, 8], strides = [1, 1]} : vector<8x32xf32> to vector<8x8xf32>
    %65 = arith.truncf %64 : vector<8x8xf32> to vector<8x8xbf16>
    %66 = vector.extract_strided_slice %39 {offsets = [0, 8], sizes = [8, 8], strides = [1, 1]} : vector<8x32xf32> to vector<8x8xf32>
    %67 = arith.truncf %66 : vector<8x8xf32> to vector<8x8xbf16>
    %cst_28 = arith.constant dense<0.000000e+00> : vector<8x8xf32>
    %68 = tpu.matmul %63, %65, %cst_28 {dimension_numbers = #tpu.dot_dimension_numbers<[1], [1], [0], [0], [0, 0, 1, 0], [], []>} : vector<8x8xbf16>, vector<8x8xbf16>, vector<8x8xf32> -> vector<8x8xf32>
    %cst_29 = arith.constant dense<0xFF800000> : vector<8xf32>
    %69 = vector.multi_reduction <maximumf>, %68, %cst_29 [1] : vector<8x8xf32> to vector<8xf32>
    %70 = vector.shape_cast %69 : vector<8xf32> to vector<8x1xf32>
    %71 = vector.broadcast %70 : vector<8x1xf32> to vector<8x8xf32>
    %72 = arith.subf %68, %71 : vector<8x8xf32>
    %73 = math.exp %72 : vector<8x8xf32>
    %cst_30 = arith.constant dense<0.000000e+00> : vector<8xf32>
    %74 = vector.multi_reduction <add>, %73, %cst_30 [1] : vector<8x8xf32> to vector<8xf32>
    %75 = vector.shape_cast %74 : vector<8xf32> to vector<8x1xf32>
    %76 = vector.broadcast %75 : vector<8x1xf32> to vector<8x8xf32>
    %77 = arith.divf %73, %76 : vector<8x8xf32>
    %c0_31 = arith.constant 0 : index
    %c1 = arith.constant 1 : index
    %c0_32 = arith.constant 0 : index
    %c0_33 = arith.constant 0 : index
    %78 = vector.load %arg10[%c0_31, %c1, %c0_32, %c0_33] : memref<1x4x8x8xf32, #tpu.memory_space<vmem>>, vector<1x1x8x8xf32>
    %79 = vector.shape_cast %78 : vector<1x1x8x8xf32> to vector<8x8xf32>
    %80 = vector.shape_cast %77 : vector<8x8xf32> to vector<1x1x8x8xf32>
    tpu.vector_store %arg10[%c0_31, %c1, %c0_32, %c0_33], %80 {strides = array<i32>} : memref<1x4x8x8xf32, #tpu.memory_space<vmem>>, vector<1x1x8x8xf32>,
    %81 = arith.truncf %77 : vector<8x8xf32> to vector<8x8xbf16>
    %cst_34 = arith.constant dense<0.000000e+00> : vector<8x8xf32>
    %82 = tpu.matmul %81, %67, %cst_34 {dimension_numbers = #tpu.dot_dimension_numbers<[1], [0], [0], [1], [0, 0, 1, 1], [], []>} : vector<8x8xbf16>, vector<8x8xbf16>, vector<8x8xf32> -> vector<8x8xf32>
    %c0_35 = arith.constant 0 : index
    %c8 = arith.constant 8 : index
    %83 = vector.load %arg11[%c0_35, %c8] : memref<8x32xf32, #tpu.memory_space<vmem>>, vector<8x8xf32>
    tpu.vector_store %arg11[%c0_35, %c8], %82 {strides = array<i32>} : memref<8x32xf32, #tpu.memory_space<vmem>>, vector<8x8xf32>,
    %84 = vector.extract_strided_slice %27 {offsets = [0, 16], sizes = [8, 8], strides = [1, 1]} : vector<8x32xf32> to vector<8x8xf32>
    %85 = arith.truncf %84 : vector<8x8xf32> to vector<8x8xbf16>
    %86 = vector.extract_strided_slice %33 {offsets = [0, 16], sizes = [8, 8], strides = [1, 1]} : vector<8x32xf32> to vector<8x8xf32>
    %87 = arith.truncf %86 : vector<8x8xf32> to vector<8x8xbf16>
    %88 = vector.extract_strided_slice %39 {offsets = [0, 16], sizes = [8, 8], strides = [1, 1]} : vector<8x32xf32> to vector<8x8xf32>
    %89 = arith.truncf %88 : vector<8x8xf32> to vector<8x8xbf16>
    %cst_36 = arith.constant dense<0.000000e+00> : vector<8x8xf32>
    %90 = tpu.matmul %85, %87, %cst_36 {dimension_numbers = #tpu.dot_dimension_numbers<[1], [1], [0], [0], [0, 0, 1, 0], [], []>} : vector<8x8xbf16>, vector<8x8xbf16>, vector<8x8xf32> -> vector<8x8xf32>
    %cst_37 = arith.constant dense<0xFF800000> : vector<8xf32>
    %91 = vector.multi_reduction <maximumf>, %90, %cst_37 [1] : vector<8x8xf32> to vector<8xf32>
    %92 = vector.shape_cast %91 : vector<8xf32> to vector<8x1xf32>
    %93 = vector.broadcast %92 : vector<8x1xf32> to vector<8x8xf32>
    %94 = arith.subf %90, %93 : vector<8x8xf32>
    %95 = math.exp %94 : vector<8x8xf32>
    %cst_38 = arith.constant dense<0.000000e+00> : vector<8xf32>
    %96 = vector.multi_reduction <add>, %95, %cst_38 [1] : vector<8x8xf32> to vector<8xf32>
    %97 = vector.shape_cast %96 : vector<8xf32> to vector<8x1xf32>
    %98 = vector.broadcast %97 : vector<8x1xf32> to vector<8x8xf32>
    %99 = arith.divf %95, %98 : vector<8x8xf32>
    %c0_39 = arith.constant 0 : index
    %c2 = arith.constant 2 : index
    %c0_40 = arith.constant 0 : index
    %c0_41 = arith.constant 0 : index
    %100 = vector.load %arg10[%c0_39, %c2, %c0_40, %c0_41] : memref<1x4x8x8xf32, #tpu.memory_space<vmem>>, vector<1x1x8x8xf32>
    %101 = vector.shape_cast %100 : vector<1x1x8x8xf32> to vector<8x8xf32>
    %102 = vector.shape_cast %99 : vector<8x8xf32> to vector<1x1x8x8xf32>
    tpu.vector_store %arg10[%c0_39, %c2, %c0_40, %c0_41], %102 {strides = array<i32>} : memref<1x4x8x8xf32, #tpu.memory_space<vmem>>, vector<1x1x8x8xf32>,
    %103 = arith.truncf %99 : vector<8x8xf32> to vector<8x8xbf16>
    %cst_42 = arith.constant dense<0.000000e+00> : vector<8x8xf32>
    %104 = tpu.matmul %103, %89, %cst_42 {dimension_numbers = #tpu.dot_dimension_numbers<[1], [0], [0], [1], [0, 0, 1, 1], [], []>} : vector<8x8xbf16>, vector<8x8xbf16>, vector<8x8xf32> -> vector<8x8xf32>
    %c0_43 = arith.constant 0 : index
    %c16 = arith.constant 16 : index
    %105 = vector.load %arg11[%c0_43, %c16] : memref<8x32xf32, #tpu.memory_space<vmem>>, vector<8x8xf32>
    tpu.vector_store %arg11[%c0_43, %c16], %104 {strides = array<i32>} : memref<8x32xf32, #tpu.memory_space<vmem>>, vector<8x8xf32>,
    %106 = vector.extract_strided_slice %27 {offsets = [0, 24], sizes = [8, 8], strides = [1, 1]} : vector<8x32xf32> to vector<8x8xf32>
    %107 = arith.truncf %106 : vector<8x8xf32> to vector<8x8xbf16>
    %108 = vector.extract_strided_slice %33 {offsets = [0, 24], sizes = [8, 8], strides = [1, 1]} : vector<8x32xf32> to vector<8x8xf32>
    %109 = arith.truncf %108 : vector<8x8xf32> to vector<8x8xbf16>
    %110 = vector.extract_strided_slice %39 {offsets = [0, 24], sizes = [8, 8], strides = [1, 1]} : vector<8x32xf32> to vector<8x8xf32>
    %111 = arith.truncf %110 : vector<8x8xf32> to vector<8x8xbf16>
    %cst_44 = arith.constant dense<0.000000e+00> : vector<8x8xf32>
    %112 = tpu.matmul %107, %109, %cst_44 {dimension_numbers = #tpu.dot_dimension_numbers<[1], [1], [0], [0], [0, 0, 1, 0], [], []>} : vector<8x8xbf16>, vector<8x8xbf16>, vector<8x8xf32> -> vector<8x8xf32>
    %cst_45 = arith.constant dense<0xFF800000> : vector<8xf32>
    %113 = vector.multi_reduction <maximumf>, %112, %cst_45 [1] : vector<8x8xf32> to vector<8xf32>
    %114 = vector.shape_cast %113 : vector<8xf32> to vector<8x1xf32>
    %115 = vector.broadcast %114 : vector<8x1xf32> to vector<8x8xf32>
    %116 = arith.subf %112, %115 : vector<8x8xf32>
    %117 = math.exp %116 : vector<8x8xf32>
    %cst_46 = arith.constant dense<0.000000e+00> : vector<8xf32>
    %118 = vector.multi_reduction <add>, %117, %cst_46 [1] : vector<8x8xf32> to vector<8xf32>
    %119 = vector.shape_cast %118 : vector<8xf32> to vector<8x1xf32>
    %120 = vector.broadcast %119 : vector<8x1xf32> to vector<8x8xf32>
    %121 = arith.divf %117, %120 : vector<8x8xf32>
    %c0_47 = arith.constant 0 : index
    %c3 = arith.constant 3 : index
    %c0_48 = arith.constant 0 : index
    %c0_49 = arith.constant 0 : index
    %122 = vector.load %arg10[%c0_47, %c3, %c0_48, %c0_49] : memref<1x4x8x8xf32, #tpu.memory_space<vmem>>, vector<1x1x8x8xf32>
    %123 = vector.shape_cast %122 : vector<1x1x8x8xf32> to vector<8x8xf32>
    %124 = vector.shape_cast %121 : vector<8x8xf32> to vector<1x1x8x8xf32>
    tpu.vector_store %arg10[%c0_47, %c3, %c0_48, %c0_49], %124 {strides = array<i32>} : memref<1x4x8x8xf32, #tpu.memory_space<vmem>>, vector<1x1x8x8xf32>,
    %125 = arith.truncf %121 : vector<8x8xf32> to vector<8x8xbf16>
    %cst_50 = arith.constant dense<0.000000e+00> : vector<8x8xf32>
    %126 = tpu.matmul %125, %111, %cst_50 {dimension_numbers = #tpu.dot_dimension_numbers<[1], [0], [0], [1], [0, 0, 1, 1], [], []>} : vector<8x8xbf16>, vector<8x8xbf16>, vector<8x8xf32> -> vector<8x8xf32>
    %c0_51 = arith.constant 0 : index
    %c24 = arith.constant 24 : index
    %127 = vector.load %arg11[%c0_51, %c24] : memref<8x32xf32, #tpu.memory_space<vmem>>, vector<8x8xf32>
    tpu.vector_store %arg11[%c0_51, %c24], %126 {strides = array<i32>} : memref<8x32xf32, #tpu.memory_space<vmem>>, vector<8x8xf32>,
    %c0_52 = arith.constant 0 : index
    %c0_53 = arith.constant 0 : index
    %128 = vector.load %arg11[%c0_52, %c0_53] : memref<8x32xf32, #tpu.memory_space<vmem>>, vector<8x32xf32>
    %129 = arith.truncf %128 : vector<8x32xf32> to vector<8x32xbf16>
    %c0_54 = arith.constant 0 : index
    %c0_55 = arith.constant 0 : index
    %130 = vector.load %arg6[%c0_54, %c0_55] : memref<32x32xbf16, #tpu.memory_space<vmem>>, vector<32x32xbf16>
    %cst_56 = arith.constant dense<0.000000e+00> : vector<8x32xf32>
    %131 = tpu.matmul %129, %130, %cst_56 {dimension_numbers = #tpu.dot_dimension_numbers<[1], [0], [0], [1], [0, 0, 1, 1], [], []>} : vector<8x32xbf16>, vector<32x32xbf16>, vector<8x32xf32> -> vector<8x32xf32>
    %132 = vector.broadcast %4 : vector<1x32xf32> to vector<8x32xf32>
    %133 = arith.addf %131, %132 : vector<8x32xf32>
    %c0_57 = arith.constant 0 : index
    %c0_58 = arith.constant 0 : index
    %c0_59 = arith.constant 0 : index
    %134 = vector.load %arg9[%c0_57, %c0_58, %c0_59] : memref<1x8x32xf32, #tpu.memory_space<vmem>>, vector<1x8x32xf32>
    %135 = vector.shape_cast %134 : vector<1x8x32xf32> to vector<8x32xf32>
    %136 = vector.shape_cast %133 : vector<8x32xf32> to vector<1x8x32xf32>
    tpu.vector_store %arg9[%c0_57, %c0_58, %c0_59], %136 {strides = array<i32>} : memref<1x8x32xf32, #tpu.memory_space<vmem>>, vector<1x8x32xf32>,
    return
  }
  func.func @transform_0(%arg0: i32) -> (i32, i32, i32) {
    %c0_i32 = arith.constant 0 : i32
    %c0_i32_0 = arith.constant 0 : i32
    %c0_i32_1 = arith.constant 0 : i32
    return %arg0, %c0_i32, %c0_i32_0 : i32, i32, i32
  }
  func.func @transform_1(%arg0: i32) -> (i32, i32, i32) {
    %c0_i32 = arith.constant 0 : i32
    %c0_i32_0 = arith.constant 0 : i32
    %c0_i32_1 = arith.constant 0 : i32
    return %arg0, %c0_i32, %c0_i32_0 : i32, i32, i32
  }
  func.func @transform_2(%arg0: i32) -> (i32, i32) {
    %c0_i32 = arith.constant 0 : i32
    %c0_i32_0 = arith.constant 0 : i32
    %c0_i32_1 = arith.constant 0 : i32
    return %c0_i32, %c0_i32_0 : i32, i32
  }
  func.func @transform_3(%arg0: i32) -> (i32, i32) {
    %c0_i32 = arith.constant 0 : i32
    %c0_i32_0 = arith.constant 0 : i32
    %c0_i32_1 = arith.constant 0 : i32
    return %c0_i32, %c0_i32_0 : i32, i32
  }
  func.func @transform_4(%arg0: i32) -> (i32, i32) {
    %c0_i32 = arith.constant 0 : i32
    %c0_i32_0 = arith.constant 0 : i32
    %c0_i32_1 = arith.constant 0 : i32
    return %c0_i32, %c0_i32_0 : i32, i32
  }
  func.func @transform_5(%arg0: i32) -> (i32, i32) {
    %c0_i32 = arith.constant 0 : i32
    %c0_i32_0 = arith.constant 0 : i32
    %c0_i32_1 = arith.constant 0 : i32
    return %c0_i32, %c0_i32_0 : i32, i32
  }
  func.func @transform_6(%arg0: i32) -> (i32, i32) {
    %c0_i32 = arith.constant 0 : i32
    %c0_i32_0 = arith.constant 0 : i32
    %c0_i32_1 = arith.constant 0 : i32
    return %c0_i32, %c0_i32_0 : i32, i32
  }
  func.func @transform_7(%arg0: i32) -> (i32, i32, i32) {
    %c0_i32 = arith.constant 0 : i32
    %c0_i32_0 = arith.constant 0 : i32
    %c0_i32_1 = arith.constant 0 : i32
    return %arg0, %c0_i32, %c0_i32_0 : i32, i32, i32
  }
  func.func @transform_8(%arg0: i32) -> (i32, i32, i32) {
    %c0_i32 = arith.constant 0 : i32
    %c0_i32_0 = arith.constant 0 : i32
    %c0_i32_1 = arith.constant 0 : i32
    return %arg0, %c0_i32, %c0_i32_0 : i32, i32, i32
  }
  func.func @transform_9(%arg0: i32) -> (i32, i32, i32, i32) {
    %c0_i32 = arith.constant 0 : i32
    %c0_i32_0 = arith.constant 0 : i32
    %c0_i32_1 = arith.constant 0 : i32
    %c0_i32_2 = arith.constant 0 : i32
    return %arg0, %c0_i32, %c0_i32_0, %c0_i32_1 : i32, i32, i32, i32
  }
}

</mosaic_0001>

<llo_original>
// kernel: tpu_custom_call.1
$region0: #{tpu_custom_call.1}
  #allocation0 [shape = 'u32[]', space=smem, size = 0x4, offset = 0x4, fixed_abs, tag = 'smem constant byte address 0x4 - core index']
  #allocation1 [shape = 'u32[144,128]{1,0:T(1,128)}', space=vmem, size = 0x12000, scoped, tag = 'internal scratch']
  #allocation2 [shape = 'f32[8,32]{1,0:T(8,128)}', space=vmem, size = 0x1000, scoped, tag = 'scratch operand']
  %s0 = inlined_call_operand.vmem [shape: f32[2,8,32], index: 0, kind: input, shape index: {}]
  %s1 = inlined_call_operand.hbm [shape: f32[2,8,32], index: 1, kind: input, shape index: {}]
  %s2 = inlined_call_operand.vmem [shape: bf16[32,32], index: 2, kind: input, shape index: {}]
  %s3 = inlined_call_operand.hbm [shape: bf16[32,32], index: 3, kind: input, shape index: {}]
  %s4 = inlined_call_operand.hbm [shape: bf16[32,32], index: 4, kind: input, shape index: {}]
  %s5 = inlined_call_operand.hbm [shape: bf16[32,32], index: 5, kind: input, shape index: {}]
  %s6 = inlined_call_operand.vmem [shape: f32[4,32], index: 6, kind: input, shape index: {}]
  %s7 = inlined_call_operand.vmem [shape: f32[2,5,32], index: 7, kind: input, shape index: {}]
  %s8 = inlined_call_operand.hbm [shape: f32[2,8,32], index: 8, kind: output, shape index: {0}]
  %s9 = inlined_call_operand.hbm [shape: f32[2,4,8,8], index: 9, kind: output, shape index: {1}]
  %10 = xla_tuple %s8, %s9
  %s11 = sld [smem:[#allocation0]]
  $region89: #{tpu_custom_call.1} parent=0
    _
  %s13 = ssub.s32 1, %s11
  %s14 = scalar_select 0, %s13, %s11
  $region1: #{tpu_custom_call.1} parent=0
    #allocation3 [shape = 'u8[8192]{0}', space=vmem, size = 0x2000, scoped, tag = 'input window, operand 1']
    #allocation4 [shape = 's32[2]{0}', space=sflag, size = 0x8, scoped, tag = 'scoped memory for tpu_custom_call.1']
    #allocation5 [shape = 's32[2]{0}', space=sflag, size = 0x8, scoped, tag = 'scoped memory for tpu_custom_call.1']
    #allocation6 [shape = 'u8[8192]{0}', space=vmem, size = 0x2000, scoped, tag = 'input window, operand 3, single buffered']
    #allocation7 [shape = 's32[1]{0}', space=sflag, size = 0x4, scoped, tag = 'scoped memory for tpu_custom_call.1']
    #allocation8 [shape = 'u8[8192]{0}', space=vmem, size = 0x2000, scoped, tag = 'input window, operand 4, single buffered']
    #allocation9 [shape = 'u8[8192]{0}', space=vmem, size = 0x2000, scoped, tag = 'input window, operand 5, single buffered']
    #allocation10 [shape = 's32[1]{0}', space=sflag, size = 0x4, scoped, tag = 'scoped memory for tpu_custom_call.1']
    #allocation11 [shape = 'u8[8192]{0}', space=vmem, size = 0x2000, scoped, tag = 'output window, operand 0']
    #allocation12 [shape = 'u8[32768]{0}', space=vmem, size = 0x8000, scoped, tag = 'output window, operand 1']
    #allocation13 [shape = 's32[2]{0}', space=sflag, size = 0x8, scoped, tag = 'scoped memory for tpu_custom_call.1']
    %15 = vsyncpa [#allocation4], 0
    %s16 = scalar_lea.sflag [#allocation4], 1
    %17 = vsyncpa %s16, 0
    %18 = vsyncpa [#allocation7], 0
    %19 = vsyncpa [#allocation10], 0
    %20 = vsyncpa [#allocation5], 0
    %s21 = scalar_lea.sflag [#allocation5], 1
    %22 = vsyncpa %s21, 0
    %23 = vsyncpa [#allocation13], 0
    %s24 = scalar_lea.sflag [#allocation13], 1
    %25 = vsyncpa %s24, 0
    loop: start=0, step=1, limit=4
    $region2: #{tpu_custom_call.1} parent=1 // loop_pre_header
      _
    $region3: #{tpu_custom_call.1} parent=1 // loop_header
      %s27 = sphi 0, %s31
      %p28 = scmp.ge.s32.totalorder %s27, 4
      %s37 = sphi 0, %s39
      %s40 = sphi 0, %s37
      %s41 = sphi 0, %s40
      %s57 = sphi 0, %s41
      %s63 = sphi 0, %s65
      %s66 = sphi 0, %s63
      %s67 = sphi 0, %s66
      %s83 = sphi 0, %s67
      %s87 = sphi 0, %s87
      %s89 = sphi 0, %s87
      %s90 = sphi 0, %s89
      %s104 = sphi 0, %s90
      %s108 = sphi 0, %s108
      %s110 = sphi 0, %s108
      %s111 = sphi 0, %s110
      %s125 = sphi 0, %s111
      %s129 = sphi 0, %s129
      %s131 = sphi 0, %s129
      %s132 = sphi 0, %s131
      %s146 = sphi 0, %s132
      %s150 = sphi 0, %s150
      %s152 = sphi 0, %s150
      %s153 = sphi 0, %s152
      %s167 = sphi 0, %s153
      %s171 = sphi 0, %s171
      %s173 = sphi 0, %s171
      %s174 = sphi 0, %s173
      %s188 = sphi 0, %s174
      %s194 = sphi 0, %s196
      %s197 = sphi 0, %s194
      %s198 = sphi 0, %s197
      %s214 = sphi 0, %s198
      %s220 = sphi 0, %s222
      %s223 = sphi 0, %s220
      %s224 = sphi 0, %s223
      %s240 = sphi 0, %s224
      %s246 = sphi 0, %s248
      %s249 = sphi 0, %s246
      %s250 = sphi 0, %s249
      %s266 = sphi 0, %s250
    $region4: #{tpu_custom_call.1} parent=1 // loop_header_branch
      %30 = sbr.rel (%p28) target = $region8
    $region5: #{tpu_custom_call.1} parent=1 // loop_body
      %s32 = ssub.s32 %s27, 1
      %s33 = ssub.s32 %s27, 2
      %s34 = sadd.s32 %s27, 1
      %s35 = ssub.s32 %s27, %s34
      %p36 = scmp.eq.s32.totalorder %s35, 0
      %s38 = sadd.s32 %s37, 1
      %s39 = scalar_select %p36, %s37, %s38
      %p42 = pneg %p36
      %p43 = scmp.eq.s32.totalorder %s27, 1
      %p44 = por %p42, %p43
      %p45 = scmp.ne.s32.totalorder %s37, %s40
      %p46 = scmp.eq.s32.totalorder %s27, 0
      %p47 = por %p45, %p46
      %p48 = scmp.ne.s32.totalorder %s37, %s40
      %p49 = scmp.eq.s32.totalorder %s32, 1
      %p50 = por %p48, %p49
      %p51 = scmp.ne.s32.totalorder %s40, %s41
      %p52 = scmp.eq.s32.totalorder %s32, 0
      %p53 = por %p51, %p52
      %p54 = scmp.ne.s32.totalorder %s40, %s41
      %p55 = scmp.eq.s32.totalorder %s33, 1
      %p56 = por %p54, %p55
      %p58 = scmp.ne.s32.totalorder %s41, %s57
      %p59 = scmp.eq.s32.totalorder %s33, 0
      %p60 = por %p58, %p59
      %s61 = ssub.s32 %s27, %s34
      %p62 = scmp.eq.s32.totalorder %s61, 0
      %s64 = sadd.s32 %s63, 1
      %s65 = scalar_select %p62, %s63, %s64
      %p68 = pneg %p62
      %p69 = scmp.eq.s32.totalorder %s27, 1
      %p70 = por %p68, %p69
      %p71 = scmp.ne.s32.totalorder %s63, %s66
      %p72 = scmp.eq.s32.totalorder %s27, 0
      %p73 = por %p71, %p72
      %p74 = scmp.ne.s32.totalorder %s63, %s66
      %p75 = scmp.eq.s32.totalorder %s32, 1
      %p76 = por %p74, %p75
      %p77 = scmp.ne.s32.totalorder %s66, %s67
      %p78 = scmp.eq.s32.totalorder %s32, 0
      %p79 = por %p77, %p78
      %p80 = scmp.ne.s32.totalorder %s66, %s67
      %p81 = scmp.eq.s32.totalorder %s33, 1
      %p82 = por %p80, %p81
      %p84 = scmp.ne.s32.totalorder %s67, %s83
      %p85 = scmp.eq.s32.totalorder %s33, 0
      %p86 = por %p84, %p85
      %s88 = sadd.s32 %s87, 1
      %p91 = scmp.eq.s32.totalorder %s27, 1
      %p92 = scmp.ne.s32.totalorder %s87, %s89
      %p93 = scmp.eq.s32.totalorder %s27, 0
      %p94 = por %p92, %p93
      %p95 = scmp.ne.s32.totalorder %s87, %s89
      %p96 = scmp.eq.s32.totalorder %s32, 1
      %p97 = por %p95, %p96
      %p98 = scmp.ne.s32.totalorder %s89, %s90
      %p99 = scmp.eq.s32.totalorder %s32, 0
      %p100 = por %p98, %p99
      %p101 = scmp.ne.s32.totalorder %s89, %s90
      %p102 = scmp.eq.s32.totalorder %s33, 1
      %p103 = por %p101, %p102
      %p105 = scmp.ne.s32.totalorder %s90, %s104
      %p106 = scmp.eq.s32.totalorder %s33, 0
      %p107 = por %p105, %p106
      %s109 = sadd.s32 %s108, 1
      %p112 = scmp.eq.s32.totalorder %s27, 1
      %p113 = scmp.ne.s32.totalorder %s108, %s110
      %p114 = scmp.eq.s32.totalorder %s27, 0
      %p115 = por %p113, %p114
      %p116 = scmp.ne.s32.totalorder %s108, %s110
      %p117 = scmp.eq.s32.totalorder %s32, 1
      %p118 = por %p116, %p117
      %p119 = scmp.ne.s32.totalorder %s110, %s111
      %p120 = scmp.eq.s32.totalorder %s32, 0
      %p121 = por %p119, %p120
      %p122 = scmp.ne.s32.totalorder %s110, %s111
      %p123 = scmp.eq.s32.totalorder %s33, 1
      %p124 = por %p122, %p123
      %p126 = scmp.ne.s32.totalorder %s111, %s125
      %p127 = scmp.eq.s32.totalorder %s33, 0
      %p128 = por %p126, %p127
      %s130 = sadd.s32 %s129, 1
      %p133 = scmp.eq.s32.totalorder %s27, 1
      %p134 = scmp.ne.s32.totalorder %s129, %s131
      %p135 = scmp.eq.s32.totalorder %s27, 0
      %p136 = por %p134, %p135
      %p137 = scmp.ne.s32.totalorder %s129, %s131
      %p138 = scmp.eq.s32.totalorder %s32, 1
      %p139 = por %p137, %p138
      %p140 = scmp.ne.s32.totalorder %s131, %s132
      %p141 = scmp.eq.s32.totalorder %s32, 0
      %p142 = por %p140, %p141
      %p143 = scmp.ne.s32.totalorder %s131, %s132
      %p144 = scmp.eq.s32.totalorder %s33, 1
      %p145 = por %p143, %p144
      %p147 = scmp.ne.s32.totalorder %s132, %s146
      %p148 = scmp.eq.s32.totalorder %s33, 0
      %p149 = por %p147, %p148
      %s151 = sadd.s32 %s150, 1
      %p154 = scmp.eq.s32.totalorder %s27, 1
      %p155 = scmp.ne.s32.totalorder %s150, %s152
      %p156 = scmp.eq.s32.totalorder %s27, 0
      %p157 = por %p155, %p156
      %p158 = scmp.ne.s32.totalorder %s150, %s152
      %p159 = scmp.eq.s32.totalorder %s32, 1
      %p160 = por %p158, %p159
      %p161 = scmp.ne.s32.totalorder %s152, %s153
      %p162 = scmp.eq.s32.totalorder %s32, 0
      %p163 = por %p161, %p162
      %p164 = scmp.ne.s32.totalorder %s152, %s153
      %p165 = scmp.eq.s32.totalorder %s33, 1
      %p166 = por %p164, %p165
      %p168 = scmp.ne.s32.totalorder %s153, %s167
      %p169 = scmp.eq.s32.totalorder %s33, 0
      %p170 = por %p168, %p169
      %s172 = sadd.s32 %s171, 1
      %p175 = scmp.eq.s32.totalorder %s27, 1
      %p176 = scmp.ne.s32.totalorder %s171, %s173
      %p177 = scmp.eq.s32.totalorder %s27, 0
      %p178 = por %p176, %p177
      %p179 = scmp.ne.s32.totalorder %s171, %s173
      %p180 = scmp.eq.s32.totalorder %s32, 1
      %p181 = por %p179, %p180
      %p182 = scmp.ne.s32.totalorder %s173, %s174
      %p183 = scmp.eq.s32.totalorder %s32, 0
      %p184 = por %p182, %p183
      %p185 = scmp.ne.s32.totalorder %s173, %s174
      %p186 = scmp.eq.s32.totalorder %s33, 1
      %p187 = por %p185, %p186
      %p189 = scmp.ne.s32.totalorder %s174, %s188
      %p190 = scmp.eq.s32.totalorder %s33, 0
      %p191 = por %p189, %p190
      %s192 = ssub.s32 %s27, %s34
      %p193 = scmp.eq.s32.totalorder %s192, 0
      %s195 = sadd.s32 %s194, 1
      %s196 = scalar_select %p193, %s194, %s195
      %p199 = pneg %p193
      %p200 = scmp.eq.s32.totalorder %s27, 1
      %p201 = por %p199, %p200
      %p202 = scmp.ne.s32.totalorder %s194, %s197
      %p203 = scmp.eq.s32.totalorder %s27, 0
      %p204 = por %p202, %p203
      %p205 = scmp.ne.s32.totalorder %s194, %s197
      %p206 = scmp.eq.s32.totalorder %s32, 1
      %p207 = por %p205, %p206
      %p208 = scmp.ne.s32.totalorder %s197, %s198
      %p209 = scmp.eq.s32.totalorder %s32, 0
      %p210 = por %p208, %p209
      %p211 = scmp.ne.s32.totalorder %s197, %s198
      %p212 = scmp.eq.s32.totalorder %s33, 1
      %p213 = por %p211, %p212
      %p215 = scmp.ne.s32.totalorder %s198, %s214
      %p216 = scmp.eq.s32.totalorder %s33, 0
      %p217 = por %p215, %p216
      %s218 = ssub.s32 %s27, %s34
      %p219 = scmp.eq.s32.totalorder %s218, 0
      %s221 = sadd.s32 %s220, 1
      %s222 = scalar_select %p219, %s220, %s221
      %p225 = pneg %p219
      %p226 = scmp.eq.s32.totalorder %s27, 1
      %p227 = por %p225, %p226
      %p228 = scmp.ne.s32.totalorder %s220, %s223
      %p229 = scmp.eq.s32.totalorder %s27, 0
      %p230 = por %p228, %p229
      %p231 = scmp.ne.s32.totalorder %s220, %s223
      %p232 = scmp.eq.s32.totalorder %s32, 1
      %p233 = por %p231, %p232
      %p234 = scmp.ne.s32.totalorder %s223, %s224
      %p235 = scmp.eq.s32.totalorder %s32, 0
      %p236 = por %p234, %p235
      %p237 = scmp.ne.s32.totalorder %s223, %s224
      %p238 = scmp.eq.s32.totalorder %s33, 1
      %p239 = por %p237, %p238
      %p241 = scmp.ne.s32.totalorder %s224, %s240
      %p242 = scmp.eq.s32.totalorder %s33, 0
      %p243 = por %p241, %p242
      %s244 = ssub.s32 %s27, %s34
      %p245 = scmp.eq.s32.totalorder %s244, 0
      %s247 = sadd.s32 %s246, 1
      %s248 = scalar_select %p245, %s246, %s247
      %p251 = pneg %p245
      %p252 = scmp.eq.s32.totalorder %s27, 1
      %p253 = por %p251, %p252
      %p254 = scmp.ne.s32.totalorder %s246, %s249
      %p255 = scmp.eq.s32.totalorder %s27, 0
      %p256 = por %p254, %p255
      %p257 = scmp.ne.s32.totalorder %s246, %s249
      %p258 = scmp.eq.s32.totalorder %s32, 1
      %p259 = por %p257, %p258
      %p260 = scmp.ne.s32.totalorder %s249, %s250
      %p261 = scmp.eq.s32.totalorder %s32, 0
      %p262 = por %p260, %p261
      %p263 = scmp.ne.s32.totalorder %s249, %s250
      %p264 = scmp.eq.s32.totalorder %s33, 1
      %p265 = por %p263, %p264
      %p267 = scmp.ne.s32.totalorder %s250, %s266
      %p268 = scmp.eq.s32.totalorder %s33, 0
      %p269 = por %p267, %p268
      %p270 = scmp.le.s32.totalorder 1, %s27
      %p271 = scmp.lt.s32.totalorder %s27, 3
      %p272 = pnand %p270, %p271
      %p273 = pneg %p272
      // Predicated region
      $region9: #{tpu_custom_call.1} parent=5 // pred_check
        _
      $region10: #{tpu_custom_call.1} parent=5 // pred_check_branch
        %275 = sbr.rel (%p272) target = $region12
      $region11: #{tpu_custom_call.1} parent=5 // pred_region
        %s276 = ssub.s32 %s27, 1
        // Predicated region
        $region13: #{tpu_custom_call.1} parent=11 // pred_check
          %p277 = pneg %p100
        $region14: #{tpu_custom_call.1} parent=11 // pred_check_branch
          %279 = sbr.rel (%p277) target = $region16
        $region15: #{tpu_custom_call.1} parent=11 // pred_region
          _
        $region16: #{tpu_custom_call.1} parent=11 // pred_fallthru
          _
        // Predicated region
        $region17: #{tpu_custom_call.1} parent=11 // pred_check
          %p280 = pneg %p121
        $region18: #{tpu_custom_call.1} parent=11 // pred_check_branch
          %282 = sbr.rel (%p280) target = $region20
        $region19: #{tpu_custom_call.1} parent=11 // pred_region
          %s284 = ssub.s32 256, 256
          %285 = vsyncadd [#allocation7], %s284
          %s286 = sshll.u32 [#allocation6], 4
          %s287 = int_to_ptr.vmem [resolvable:$true] %s286
          %292 = dma.hbm_to_vmem [thread:$0]  %s3, 256, %s287, [#allocation7], 64, 64, 4
        $region20: #{tpu_custom_call.1} parent=11 // pred_fallthru
          _
        // Predicated region
        $region21: #{tpu_custom_call.1} parent=11 // pred_check
          %p293 = pneg %p142
        $region22: #{tpu_custom_call.1} parent=11 // pred_check_branch
          %295 = sbr.rel (%p293) target = $region24
        $region23: #{tpu_custom_call.1} parent=11 // pred_region
          %s297 = ssub.s32 256, 256
          %298 = vsyncadd [#allocation7], %s297
          %s299 = sshll.u32 [#allocation8], 4
          %s300 = int_to_ptr.vmem [resolvable:$true] %s299
          %305 = dma.hbm_to_vmem [thread:$0]  %s4, 256, %s300, [#allocation7], 64, 64, 4
        $region24: #{tpu_custom_call.1} parent=11 // pred_fallthru
          _
        // Predicated region
        $region25: #{tpu_custom_call.1} parent=11 // pred_check
          %p306 = pneg %p163
        $region26: #{tpu_custom_call.1} parent=11 // pred_check_branch
          %308 = sbr.rel (%p306) target = $region28
        $region27: #{tpu_custom_call.1} parent=11 // pred_region
          %s310 = ssub.s32 256, 256
          %311 = vsyncadd [#allocation10], %s310
          %s312 = sshll.u32 [#allocation9], 4
          %s313 = int_to_ptr.vmem [resolvable:$true] %s312
          %318 = dma.hbm_to_vmem [thread:$0]  %s5, 256, %s313, [#allocation10], 64, 64, 4
        $region28: #{tpu_custom_call.1} parent=11 // pred_fallthru
          _
        // Predicated region
        $region29: #{tpu_custom_call.1} parent=11 // pred_check
          %p319 = pneg %p184
        $region30: #{tpu_custom_call.1} parent=11 // pred_check_branch
          %321 = sbr.rel (%p319) target = $region32
        $region31: #{tpu_custom_call.1} parent=11 // pred_region
          _
        $region32: #{tpu_custom_call.1} parent=11 // pred_fallthru
          _
      $region12: #{tpu_custom_call.1} parent=5 // pred_fallthru
        _
      %p322 = scmp.lt.s32.totalorder %s27, 2
      // Predicated region
      $region33: #{tpu_custom_call.1} parent=5 // pred_check
        %p323 = pneg %p322
      $region34: #{tpu_custom_call.1} parent=5 // pred_check_branch
        %325 = sbr.rel (%p323) target = $region36
      $region35: #{tpu_custom_call.1} parent=5 // pred_region
        // Predicated region
        $region37: #{tpu_custom_call.1} parent=35 // pred_check
          %p326 = pneg %p47
        $region38: #{tpu_custom_call.1} parent=35 // pred_check_branch
          %328 = sbr.rel (%p326) target = $region40
        $region39: #{tpu_custom_call.1} parent=35 // pred_region
          %p329 = scmp.lt.s32.totalorder %s27, 1
          %s330 = scalar_select %p329, %s27, 1
          %s331 = smul.addr %s330, 8
          %s332 = scalar_lea.vmem %s0, %s331
        $region40: #{tpu_custom_call.1} parent=35 // pred_fallthru
          _
        // Predicated region
        $region41: #{tpu_custom_call.1} parent=35 // pred_check
          %p333 = pneg %p73
        $region42: #{tpu_custom_call.1} parent=35 // pred_check_branch
          %335 = sbr.rel (%p333) target = $region44
        $region43: #{tpu_custom_call.1} parent=35 // pred_region
          %s336 = sand.u32 %s63, 1
          %s337 = scalar_lea.sflag [#allocation4], %s336
          %s338 = sand.u32 %s63, 1
          %s339 = smul.addr %s338, 8
          %s340 = scalar_lea.vmem [#allocation3], %s339
          %s342 = ssub.s32 128, 128
          %343 = vsyncadd %s337, %s342
          %s344 = smul.addr %s27, 128
          %s345 = scalar_lea.hbm %s1, %s344
          %s347 = sshll.u32 %s340, 4
          %s348 = int_to_ptr.vmem [resolvable:$true] %s347
          %350 = dma.hbm_to_vmem [thread:$0]  %s345, 128, %s348, %s337
        $region44: #{tpu_custom_call.1} parent=35 // pred_fallthru
          _
        // Predicated region
        $region45: #{tpu_custom_call.1} parent=35 // pred_check
          %p351 = pneg %p204
        $region46: #{tpu_custom_call.1} parent=35 // pred_check_branch
          %353 = sbr.rel (%p351) target = $region48
        $region47: #{tpu_custom_call.1} parent=35 // pred_region
          %p354 = scmp.lt.s32.totalorder %s27, 1
          %s355 = scalar_select %p354, %s27, 1
          %s356 = smul.addr %s355, 8
          %s357 = scalar_lea.vmem %s7, %s356
        $region48: #{tpu_custom_call.1} parent=35 // pred_fallthru
          _
      $region36: #{tpu_custom_call.1} parent=5 // pred_fallthru
        _
      %p358 = scmp.le.s32.totalorder 1, %s27
      %p359 = scmp.lt.s32.totalorder %s27, 3
      %p360 = pnand %p358, %p359
      %p361 = pneg %p360
      // Predicated region
      $region49: #{tpu_custom_call.1} parent=5 // pred_check
        _
      $region50: #{tpu_custom_call.1} parent=5 // pred_check_branch
        %363 = sbr.rel (%p360) target = $region52
      $region51: #{tpu_custom_call.1} parent=5 // pred_region
        %s364 = ssub.s32 %s27, 1
        %s365 = sand.u32 %s66, 1
        %s366 = scalar_lea.sflag [#allocation4], %s365
        %s367 = sand.u32 %s66, 1
        %s368 = smul.addr %s367, 8
        %s369 = scalar_lea.vmem [#allocation3], %s368
        // Predicated region
        $region53: #{tpu_custom_call.1} parent=51 // pred_check
          %p370 = pneg %p79
        $region54: #{tpu_custom_call.1} parent=51 // pred_check_branch
          %372 = sbr.rel (%p370) target = $region56
        $region55: #{tpu_custom_call.1} parent=51 // pred_region
          %373 = dma.done %s366, 128
        $region56: #{tpu_custom_call.1} parent=51 // pred_fallthru
          _
        // Predicated region
        $region57: #{tpu_custom_call.1} parent=51 // pred_check
          %p374 = pneg %p121
        $region58: #{tpu_custom_call.1} parent=51 // pred_check_branch
          %376 = sbr.rel (%p374) target = $region60
        $region59: #{tpu_custom_call.1} parent=51 // pred_region
          %377 = dma.done [#allocation7], 256
        $region60: #{tpu_custom_call.1} parent=51 // pred_fallthru
          _
        // Predicated region
        $region61: #{tpu_custom_call.1} parent=51 // pred_check
          %p378 = pneg %p142
        $region62: #{tpu_custom_call.1} parent=51 // pred_check_branch
          %380 = sbr.rel (%p378) target = $region64
        $region63: #{tpu_custom_call.1} parent=51 // pred_region
          %381 = dma.done [#allocation7], 256
        $region64: #{tpu_custom_call.1} parent=51 // pred_fallthru
          _
        // Predicated region
        $region65: #{tpu_custom_call.1} parent=51 // pred_check
          %p382 = pneg %p163
        $region66: #{tpu_custom_call.1} parent=51 // pred_check_branch
          %384 = sbr.rel (%p382) target = $region68
        $region67: #{tpu_custom_call.1} parent=51 // pred_region
          %385 = dma.done [#allocation10], 256
        $region68: #{tpu_custom_call.1} parent=51 // pred_fallthru
          _
        %p386 = scmp.lt.s32.totalorder %s32, 1
        %s387 = scalar_select %p386, %s32, 1
        %s388 = smul.addr %s387, 8
        %s389 = scalar_lea.vmem %s0, %s388
        %p390 = pneg %p53
        %p391 = pneg %p50
        %s392 = sand.u32 %s66, 1
        %s393 = scalar_lea.sflag [#allocation4], %s392
        %s394 = sand.u32 %s66, 1
        %s395 = smul.addr %s394, 8
        %s396 = scalar_lea.vmem [#allocation3], %s395
        %p397 = pneg %p79
        %p398 = pneg %p76
        %p399 = pneg %p100
        %p400 = pneg %p97
        %p401 = pneg %p121
        %p402 = pneg %p118
        %p403 = pneg %p142
        %p404 = pneg %p139
        %p405 = pneg %p163
        %p406 = pneg %p160
        %p407 = pneg %p184
        %p408 = pneg %p181
        %p409 = scmp.lt.s32.totalorder %s32, 1
        %s410 = scalar_select %p409, %s32, 1
        %s411 = smul.addr %s410, 8
        %s412 = scalar_lea.vmem %s7, %s411
        %p413 = pneg %p210
        %p414 = pneg %p207
        %p415 = pneg %p236
        %p416 = pneg %p233
        %s417 = sand.u32 %s223, 1
        %s418 = scalar_lea.sflag [#allocation5], %s417
        %s419 = sand.u32 %s223, 1
        %s420 = smul.addr %s419, 8
        %s421 = scalar_lea.vmem [#allocation11], %s420
        %p422 = pneg %p262
        %p423 = pneg %p259
        %s424 = sand.u32 %s249, 1
        %s425 = scalar_lea.sflag [#allocation13], %s424
        %s426 = sand.u32 %s249, 1
        %s427 = smul.addr %s426, 32
        %s428 = scalar_lea.vmem [#allocation12], %s427
        %p429 = scmp.lt.s32.totalorder %s32, 1
        %s430 = scalar_select %p429, %s32, 1
        %s431 = smul.addr %s430, 8
        %s432 = scalar_lea.vmem %s0, %s431
        %p433 = scmp.lt.s32.totalorder %s32, 1
        %s434 = scalar_select %p433, %s32, 1
        %s435 = smul.addr %s434, 8
        %s436 = scalar_lea.vmem %s7, %s435
        %v438 = vld [vmem:[%s6] sm:$0xf]
        %v439 = vld [vmem:[%s436] sm:$0x1f]
        %v440 = vld [vmem:[%s432] sm:$0xff]
        %v441 = vlaneseq
        %v442 = vshrl.u32 %v441, 7
        %v443 = vsub.s32 0, %v442
        %v444 = vrot.slane %v439, %v443
        %v445 = vmul.f32 %v440, %v444
        %v446 = vpack.c.bf16 %v445, %v445
        %v447 = vld [vmem:[%s369] sm:$0xff]
        %v448 = vlaneseq
        %v449 = vshrl.u32 %v448, 7
        %v450 = vsub.s32 1, %v449
        %v451 = vrot.slane %v439, %v450
        %v452 = vmul.f32 %v447, %v451
        %v453 = vpack.c.bf16 %v452, %v452
        %v454 = vld [vmem:[%s2] sm:$0xf]
        %v455 = vld [vmem:[%s2 + $0x4] sm:$0xf]
        %v456 = vld [vmem:[%s2 + $0x8] sm:$0xf]
        %v457 = vld [vmem:[%s2 + $0xc] sm:$0xf]
        %v462 = vunpack.c.l.b16 %v454
        %v463 = vunpack.c.l.b16 %v455
        %v464 = vunpack.c.l.b16 %v456
        %v465 = vunpack.c.l.b16 %v457
        %v466 = vpack.c.b16 %v463, %v462
        %v467 = vpack.c.b16 %v465, %v464
        %vm470 = vcmask 261120
        %v472 = vsel %vm470, %v446, 0
        %474 = vmatprep.subr.bf16.mxu0 0
        %475 = vmatpush1.bf16.msra.mxu0 %v466
        %476 = vmatprep.subr.bf16.mxu0 0
        %477 = vmatpush1.bf16.msra.mxu0 %v467
        %478 = vmatprep.subr.bf16.mxu0 0
        %479 = vmatpush1.bf16.msra.mxu0 0
        %480 = vmatprep.subr.bf16.mxu0 0
        %481 = vmatpush1.bf16.msra.mxu0 0
        %482 = vmatprep.subr.bf16.mxu0 0
        %483 = vmatpush1.bf16.msra.mxu0 0
        %484 = vmatprep.subr.bf16.mxu0 0
        %485 = vmatpush1.bf16.msra.mxu0 0
        %486 = vmatprep.subr.bf16.mxu0 0
        %487 = vmatpush1.bf16.msra.mxu0 0
        %488 = vmatprep.subr.bf16.mxu0 0
        %489 = vmatpush1.bf16.msra.mxu0 0
        %490 = vmatprep.subr.bf16.mxu0 0
        %491 = vmatpush1.bf16.msra.mxu0 0
        %492 = vmatprep.subr.bf16.mxu0 0
        %493 = vmatpush1.bf16.msra.mxu0 0
        %494 = vmatprep.subr.bf16.mxu0 0
        %495 = vmatpush1.bf16.msra.mxu0 0
        %496 = vmatprep.subr.bf16.mxu0 0
        %497 = vmatpush1.bf16.msra.mxu0 0
        %498 = vmatprep.subr.bf16.mxu0 0
        %499 = vmatpush1.bf16.msra.mxu0 0
        %500 = vmatprep.subr.bf16.mxu0 0
        %501 = vmatpush1.bf16.msra.mxu0 0
        %502 = vmatprep.subr.bf16.mxu0 0
        %503 = vmatpush1.bf16.msra.mxu0 0
        %504 = vmatprep.subr.bf16.mxu0 0
        %505 = vmatpush1.bf16.msra.mxu0 0
        %506 = vmatprep.mubr.bf16.mxu0 0
        %507 = vmatmul.mubr.bf16.gmra.mrb[0].mxu0 %v472
        %v508 = vpop.f32.mrb[0].mxu0
        %v509 = vadd.f32 0.0, %v508
        %v510 = vpop.f32.mrb[0].mxu0
        %v511 = vpop.f32.mrb[0].mxu0
        %v512 = vpop.f32.mrb[0].mxu0
        %513 = vdwg.mxu0
        %v514 = vlaneseq
        %v515 = vshrl.u32 %v514, 7
        %v516 = vsub.s32 2, %v515
        %v517 = vrot.slane %v439, %v516
        %v518 = vmul.f32 %v509, %v517
        %v519 = vlaneseq
        %v520 = vshrl.u32 %v519, 7
        %v521 = vsub.s32 0, %v520
        %v522 = vrot.slane %v438, %v521
        %v523 = vadd.f32 %v518, %v522
        %v524 = vld [vmem:[#allocation6] sm:$0xf]
        %v525 = vld [vmem:[#allocation6 + $0x4] sm:$0xf]
        %v526 = vld [vmem:[#allocation6 + $0x8] sm:$0xf]
        %v527 = vld [vmem:[#allocation6 + $0xc] sm:$0xf]
        %v532 = vunpack.c.l.b16 %v524
        %v533 = vunpack.c.l.b16 %v525
        %v534 = vunpack.c.l.b16 %v526
        %v535 = vunpack.c.l.b16 %v527
        %v536 = vpack.c.b16 %v533, %v532
        %v537 = vpack.c.b16 %v535, %v534
        %v541 = vsel %vm470, %v453, 0
        %543 = vmatprep.subr.bf16.mxu0 0
        %544 = vmatpush1.bf16.msra.mxu0 %v536
        %545 = vmatprep.subr.bf16.mxu0 0
        %546 = vmatpush1.bf16.msra.mxu0 %v537
        %547 = vmatprep.subr.bf16.mxu0 0
        %548 = vmatpush1.bf16.msra.mxu0 0
        %549 = vmatprep.subr.bf16.mxu0 0
        %550 = vmatpush1.bf16.msra.mxu0 0
        %551 = vmatprep.subr.bf16.mxu0 0
        %552 = vmatpush1.bf16.msra.mxu0 0
        %553 = vmatprep.subr.bf16.mxu0 0
        %554 = vmatpush1.bf16.msra.mxu0 0
        %555 = vmatprep.subr.bf16.mxu0 0
        %556 = vmatpush1.bf16.msra.mxu0 0
        %557 = vmatprep.subr.bf16.mxu0 0
        %558 = vmatpush1.bf16.msra.mxu0 0
        %559 = vmatprep.subr.bf16.mxu0 0
        %560 = vmatpush1.bf16.msra.mxu0 0
        %561 = vmatprep.subr.bf16.mxu0 0
        %562 = vmatpush1.bf16.msra.mxu0 0
        %563 = vmatprep.subr.bf16.mxu0 0
        %564 = vmatpush1.bf16.msra.mxu0 0
        %565 = vmatprep.subr.bf16.mxu0 0
        %566 = vmatpush1.bf16.msra.mxu0 0
        %567 = vmatprep.subr.bf16.mxu0 0
        %568 = vmatpush1.bf16.msra.mxu0 0
        %569 = vmatprep.subr.bf16.mxu0 0
        %570 = vmatpush1.bf16.msra.mxu0 0
        %571 = vmatprep.subr.bf16.mxu0 0
        %572 = vmatpush1.bf16.msra.mxu0 0
        %573 = vmatprep.subr.bf16.mxu0 0
        %574 = vmatpush1.bf16.msra.mxu0 0
        %575 = vmatprep.mubr.bf16.mxu0 0
        %576 = vmatmul.mubr.bf16.gmra.mrb[0].mxu0 %v541
        %v577 = vpop.f32.mrb[0].mxu0
        %v578 = vadd.f32 0.0, %v577
        %v579 = vpop.f32.mrb[0].mxu0
        %v580 = vpop.f32.mrb[0].mxu0
        %v581 = vpop.f32.mrb[0].mxu0
        %582 = vdwg.mxu0
        %v583 = vlaneseq
        %v584 = vshrl.u32 %v583, 7
        %v585 = vsub.s32 3, %v584
        %v586 = vrot.slane %v439, %v585
        %v587 = vmul.f32 %v578, %v586
        %v588 = vlaneseq
        %v589 = vshrl.u32 %v588, 7
        %v590 = vsub.s32 1, %v589
        %v591 = vrot.slane %v438, %v590
        %v592 = vadd.f32 %v587, %v591
        %v593 = vld [vmem:[#allocation8] sm:$0xf]
        %v594 = vld [vmem:[#allocation8 + $0x4] sm:$0xf]
        %v595 = vld [vmem:[#allocation8 + $0x8] sm:$0xf]
        %v596 = vld [vmem:[#allocation8 + $0xc] sm:$0xf]
        %v601 = vunpack.c.l.b16 %v593
        %v602 = vunpack.c.l.b16 %v594
        %v603 = vunpack.c.l.b16 %v595
        %v604 = vunpack.c.l.b16 %v596
        %v605 = vpack.c.b16 %v602, %v601
        %v606 = vpack.c.b16 %v604, %v603
        %609 = vmatprep.subr.bf16.mxu0 0
        %610 = vmatpush1.bf16.msra.mxu0 %v605
        %611 = vmatprep.subr.bf16.mxu0 0
        %612 = vmatpush1.bf16.msra.mxu0 %v606
        %613 = vmatprep.subr.bf16.mxu0 0
        %614 = vmatpush1.bf16.msra.mxu0 0
        %615 = vmatprep.subr.bf16.mxu0 0
        %616 = vmatpush1.bf16.msra.mxu0 0
        %617 = vmatprep.subr.bf16.mxu0 0
        %618 = vmatpush1.bf16.msra.mxu0 0
        %619 = vmatprep.subr.bf16.mxu0 0
        %620 = vmatpush1.bf16.msra.mxu0 0
        %621 = vmatprep.subr.bf16.mxu0 0
        %622 = vmatpush1.bf16.msra.mxu0 0
        %623 = vmatprep.subr.bf16.mxu0 0
        %624 = vmatpush1.bf16.msra.mxu0 0
        %625 = vmatprep.subr.bf16.mxu0 0
        %626 = vmatpush1.bf16.msra.mxu0 0
        %627 = vmatprep.subr.bf16.mxu0 0
        %628 = vmatpush1.bf16.msra.mxu0 0
        %629 = vmatprep.subr.bf16.mxu0 0
        %630 = vmatpush1.bf16.msra.mxu0 0
        %631 = vmatprep.subr.bf16.mxu0 0
        %632 = vmatpush1.bf16.msra.mxu0 0
        %633 = vmatprep.subr.bf16.mxu0 0
        %634 = vmatpush1.bf16.msra.mxu0 0
        %635 = vmatprep.subr.bf16.mxu0 0
        %636 = vmatpush1.bf16.msra.mxu0 0
        %637 = vmatprep.subr.bf16.mxu0 0
        %638 = vmatpush1.bf16.msra.mxu0 0
        %639 = vmatprep.subr.bf16.mxu0 0
        %640 = vmatpush1.bf16.msra.mxu0 0
        %641 = vmatprep.mubr.bf16.mxu0 0
        %642 = vmatmul.mubr.bf16.gmra.mrb[0].mxu0 %v541
        %v643 = vpop.f32.mrb[0].mxu0
        %v644 = vadd.f32 0.0, %v643
        %v645 = vpop.f32.mrb[0].mxu0
        %v646 = vpop.f32.mrb[0].mxu0
        %v647 = vpop.f32.mrb[0].mxu0
        %648 = vdwg.mxu0
        %v649 = vlaneseq
        %v650 = vshrl.u32 %v649, 7
        %v651 = vsub.s32 4, %v650
        %v652 = vrot.slane %v439, %v651
        %v653 = vmul.f32 %v644, %v652
        %v654 = vlaneseq
        %v655 = vshrl.u32 %v654, 7
        %v656 = vsub.s32 2, %v655
        %v657 = vrot.slane %v438, %v656
        %v658 = vadd.f32 %v653, %v657
        %v659 = vpack.c.bf16 %v523, %v523
        %v660 = vpack.c.bf16 %v592, %v592
        %v661 = vpack.c.bf16 %v658, %v658
        %vm662 = vcmask 64512
        %v664 = vsel %vm662, %v659, 0
        %v667 = vsel %vm662, %v660, 0
        %669 = vmatprep.subr.bf16.mxu0 0
        %670 = vmatpush1.bf16.xpose.msra.mxu0 %v667
        %671 = vmatprep.subr.bf16.mxu0 0
        %672 = vmatpush1.bf16.xpose.msra.mxu0 0
        %673 = vmatprep.subr.bf16.mxu0 0
        %674 = vmatpush1.bf16.xpose.msra.mxu0 0
        %675 = vmatprep.subr.bf16.mxu0 0
        %676 = vmatpush1.bf16.xpose.msra.mxu0 0
        %677 = vmatprep.subr.bf16.mxu0 0
        %678 = vmatpush1.bf16.xpose.msra.mxu0 0
        %679 = vmatprep.subr.bf16.mxu0 0
        %680 = vmatpush1.bf16.xpose.msra.mxu0 0
        %681 = vmatprep.subr.bf16.mxu0 0
        %682 = vmatpush1.bf16.xpose.msra.mxu0 0
        %683 = vmatprep.subr.bf16.mxu0 0
        %684 = vmatpush1.bf16.xpose.msra.mxu0 0
        %685 = vmatprep.subr.bf16.mxu0 0
        %686 = vmatpush1.bf16.xpose.msra.mxu0 0
        %687 = vmatprep.subr.bf16.mxu0 0
        %688 = vmatpush1.bf16.xpose.msra.mxu0 0
        %689 = vmatprep.subr.bf16.mxu0 0
        %690 = vmatpush1.bf16.xpose.msra.mxu0 0
        %691 = vmatprep.subr.bf16.mxu0 0
        %692 = vmatpush1.bf16.xpose.msra.mxu0 0
        %693 = vmatprep.subr.bf16.mxu0 0
        %694 = vmatpush1.bf16.xpose.msra.mxu0 0
        %695 = vmatprep.subr.bf16.mxu0 0
        %696 = vmatpush1.bf16.xpose.msra.mxu0 0
        %697 = vmatprep.subr.bf16.mxu0 0
        %698 = vmatpush1.bf16.xpose.msra.mxu0 0
        %699 = vmatprep.subr.bf16.mxu0 0
        %700 = vmatpush1.bf16.xpose.msra.mxu0 0
        %701 = vmatprep.mubr.bf16.mxu0 0
        %702 = vmatmul.mubr.bf16.gmra.mrb[0].mxu0 %v664
        %v703 = vpop.f32.mrb[0].mxu0
        %v704 = vadd.f32 0.0, %v703
        %v705 = vpop.f32.mrb[0].mxu0
        %v706 = vpop.f32.mrb[0].mxu0
        %v707 = vpop.f32.mrb[0].mxu0
        %708 = vdwg.mxu0
        %v709 = vsel %vm662, %v704, -inf
        %710 = vmax.xlane.f32.xlu0 %v709
        %v711 = vpop.xlane.xlu0 %710
        %v712 = vsub.f32 %v704, %v711
        %v713 = vmul.f32 %v712, 1.442695
        %v714 = vpow.pop %v713
        %v715 = vsel %vm662, %v714, 0.0
        %716 = vadd.xlane.f32.xlu0 %v715
        %v717 = vpop.xlane.xlu0 %716
        %v718 = vrcp.pop %v717
        %v719 = vmul.f32 %v714, %v718
        %720 = vst.msk [vmem:[%s428] sm:$0xff] %vm662, %v719
        %v721 = vpack.c.bf16 %v719, %v719
        %v723 = vsel %vm662, %v721, 0
        %vm725 = vcmask 1043456
        %v727 = vsel %vm725, %v661, 0
        %729 = vmatprep.subr.bf16.mxu0 0
        %730 = vmatpush1.bf16.msra.mxu0 %v727
        %731 = vmatprep.subr.bf16.mxu0 0
        %732 = vmatpush1.bf16.msra.mxu0 0
        %733 = vmatprep.subr.bf16.mxu0 0
        %734 = vmatpush1.bf16.msra.mxu0 0
        %735 = vmatprep.subr.bf16.mxu0 0
        %736 = vmatpush1.bf16.msra.mxu0 0
        %737 = vmatprep.subr.bf16.mxu0 0
        %738 = vmatpush1.bf16.msra.mxu0 0
        %739 = vmatprep.subr.bf16.mxu0 0
        %740 = vmatpush1.bf16.msra.mxu0 0
        %741 = vmatprep.subr.bf16.mxu0 0
        %742 = vmatpush1.bf16.msra.mxu0 0
        %743 = vmatprep.subr.bf16.mxu0 0
        %744 = vmatpush1.bf16.msra.mxu0 0
        %745 = vmatprep.subr.bf16.mxu0 0
        %746 = vmatpush1.bf16.msra.mxu0 0
        %747 = vmatprep.subr.bf16.mxu0 0
        %748 = vmatpush1.bf16.msra.mxu0 0
        %749 = vmatprep.subr.bf16.mxu0 0
        %750 = vmatpush1.bf16.msra.mxu0 0
        %751 = vmatprep.subr.bf16.mxu0 0
        %752 = vmatpush1.bf16.msra.mxu0 0
        %753 = vmatprep.subr.bf16.mxu0 0
        %754 = vmatpush1.bf16.msra.mxu0 0
        %755 = vmatprep.subr.bf16.mxu0 0
        %756 = vmatpush1.bf16.msra.mxu0 0
        %757 = vmatprep.subr.bf16.mxu0 0
        %758 = vmatpush1.bf16.msra.mxu0 0
        %759 = vmatprep.subr.bf16.mxu0 0
        %760 = vmatpush1.bf16.msra.mxu0 0
        %761 = vmatprep.mubr.bf16.mxu0 0
        %762 = vmatmul.mubr.bf16.gmra.mrb[0].mxu0 %v723
        %v763 = vpop.f32.mrb[0].mxu0
        %v764 = vadd.f32 0.0, %v763
        %v765 = vpop.f32.mrb[0].mxu0
        %v766 = vpop.f32.mrb[0].mxu0
        %v767 = vpop.f32.mrb[0].mxu0
        %768 = vdwg.mxu0
        %769 = vst.msk [vmem:[#allocation2] sm:$0xff] %vm662, %v764
        %771 = vrot.lane.b32.xlu0 %v659, 120
        %v772 = vpop.permute.xlu0 %771
        %774 = vrot.lane.b32.xlu0 %v660, 120
        %v775 = vpop.permute.xlu0 %774
        %v777 = vsel %vm662, %v772, 0
        %v780 = vsel %vm662, %v775, 0
        %782 = vmatprep.subr.bf16.mxu0 0
        %783 = vmatpush1.bf16.xpose.msra.mxu0 %v780
        %784 = vmatprep.subr.bf16.mxu0 0
        %785 = vmatpush1.bf16.xpose.msra.mxu0 0
        %786 = vmatprep.subr.bf16.mxu0 0
        %787 = vmatpush1.bf16.xpose.msra.mxu0 0
        %788 = vmatprep.subr.bf16.mxu0 0
        %789 = vmatpush1.bf16.xpose.msra.mxu0 0
        %790 = vmatprep.subr.bf16.mxu0 0
        %791 = vmatpush1.bf16.xpose.msra.mxu0 0
        %792 = vmatprep.subr.bf16.mxu0 0
        %793 = vmatpush1.bf16.xpose.msra.mxu0 0
        %794 = vmatprep.subr.bf16.mxu0 0
        %795 = vmatpush1.bf16.xpose.msra.mxu0 0
        %796 = vmatprep.subr.bf16.mxu0 0
        %797 = vmatpush1.bf16.xpose.msra.mxu0 0
        %798 = vmatprep.subr.bf16.mxu0 0
        %799 = vmatpush1.bf16.xpose.msra.mxu0 0
        %800 = vmatprep.subr.bf16.mxu0 0
        %801 = vmatpush1.bf16.xpose.msra.mxu0 0
        %802 = vmatprep.subr.bf16.mxu0 0
        %803 = vmatpush1.bf16.xpose.msra.mxu0 0
        %804 = vmatprep.subr.bf16.mxu0 0
        %805 = vmatpush1.bf16.xpose.msra.mxu0 0
        %806 = vmatprep.subr.bf16.mxu0 0
        %807 = vmatpush1.bf16.xpose.msra.mxu0 0
        %808 = vmatprep.subr.bf16.mxu0 0
        %809 = vmatpush1.bf16.xpose.msra.mxu0 0
        %810 = vmatprep.subr.bf16.mxu0 0
        %811 = vmatpush1.bf16.xpose.msra.mxu0 0
        %812 = vmatprep.subr.bf16.mxu0 0
        %813 = vmatpush1.bf16.xpose.msra.mxu0 0
        %814 = vmatprep.mubr.bf16.mxu0 0
        %815 = vmatmul.mubr.bf16.gmra.mrb[0].mxu0 %v777
        %v816 = vpop.f32.mrb[0].mxu0
        %v817 = vadd.f32 0.0, %v816
        %v818 = vpop.f32.mrb[0].mxu0
        %v819 = vpop.f32.mrb[0].mxu0
        %v820 = vpop.f32.mrb[0].mxu0
        %821 = vdwg.mxu0
        %v822 = vsel %vm662, %v817, -inf
        %823 = vmax.xlane.f32.xlu0 %v822
        %v824 = vpop.xlane.xlu0 %823
        %v825 = vsub.f32 %v817, %v824
        %v826 = vmul.f32 %v825, 1.442695
        %v827 = vpow.pop %v826
        %v828 = vsel %vm662, %v827, 0.0
        %829 = vadd.xlane.f32.xlu0 %v828
        %v830 = vpop.xlane.xlu0 %829
        %v831 = vrcp.pop %v830
        %v832 = vmul.f32 %v827, %v831
        %s833 = scalar_lea.vmem %s428, 8 [#allocation12]
        %834 = vst.msk [vmem:[%s833] sm:$0xff] %vm662, %v832
        %v835 = vpack.c.bf16 %v832, %v832
        %837 = vrot.lane.b32.xlu0 %v661, 120
        %v838 = vpop.permute.xlu0 %837
        %v840 = vsel %vm662, %v835, 0
        %v843 = vsel %vm725, %v838, 0
        %845 = vmatprep.subr.bf16.mxu0 0
        %846 = vmatpush1.bf16.msra.mxu0 %v843
        %847 = vmatprep.subr.bf16.mxu0 0
        %848 = vmatpush1.bf16.msra.mxu0 0
        %849 = vmatprep.subr.bf16.mxu0 0
        %850 = vmatpush1.bf16.msra.mxu0 0
        %851 = vmatprep.subr.bf16.mxu0 0
        %852 = vmatpush1.bf16.msra.mxu0 0
        %853 = vmatprep.subr.bf16.mxu0 0
        %854 = vmatpush1.bf16.msra.mxu0 0
        %855 = vmatprep.subr.bf16.mxu0 0
        %856 = vmatpush1.bf16.msra.mxu0 0
        %857 = vmatprep.subr.bf16.mxu0 0
        %858 = vmatpush1.bf16.msra.mxu0 0
        %859 = vmatprep.subr.bf16.mxu0 0
        %860 = vmatpush1.bf16.msra.mxu0 0
        %861 = vmatprep.subr.bf16.mxu0 0
        %862 = vmatpush1.bf16.msra.mxu0 0
        %863 = vmatprep.subr.bf16.mxu0 0
        %864 = vmatpush1.bf16.msra.mxu0 0
        %865 = vmatprep.subr.bf16.mxu0 0
        %866 = vmatpush1.bf16.msra.mxu0 0
        %867 = vmatprep.subr.bf16.mxu0 0
        %868 = vmatpush1.bf16.msra.mxu0 0
        %869 = vmatprep.subr.bf16.mxu0 0
        %870 = vmatpush1.bf16.msra.mxu0 0
        %871 = vmatprep.subr.bf16.mxu0 0
        %872 = vmatpush1.bf16.msra.mxu0 0
        %873 = vmatprep.subr.bf16.mxu0 0
        %874 = vmatpush1.bf16.msra.mxu0 0
        %875 = vmatprep.subr.bf16.mxu0 0
        %876 = vmatpush1.bf16.msra.mxu0 0
        %877 = vmatprep.mubr.bf16.mxu0 0
        %878 = vmatmul.mubr.bf16.gmra.mrb[0].mxu0 %v840
        %v879 = vpop.f32.mrb[0].mxu0
        %v880 = vadd.f32 0.0, %v879
        %v881 = vpop.f32.mrb[0].mxu0
        %v882 = vpop.f32.mrb[0].mxu0
        %v883 = vpop.f32.mrb[0].mxu0
        %884 = vdwg.mxu0
        %886 = vrot.lane.b32.xlu0 %v880, 8
        %v887 = vpop.permute.xlu0 %886
        %vm889 = vcmask 130112
        %890 = vst.msk [vmem:[#allocation2] sm:$0xff] %vm889, %v887
        %891 = vrot.lane.b32.xlu0 %v659, 112
        %v892 = vpop.permute.xlu0 %891
        %893 = vrot.lane.b32.xlu0 %v660, 112
        %v894 = vpop.permute.xlu0 %893
        %v896 = vsel %vm662, %v892, 0
        %v899 = vsel %vm662, %v894, 0
        %901 = vmatprep.subr.bf16.mxu0 0
        %902 = vmatpush1.bf16.xpose.msra.mxu0 %v899
        %903 = vmatprep.subr.bf16.mxu0 0
        %904 = vmatpush1.bf16.xpose.msra.mxu0 0
        %905 = vmatprep.subr.bf16.mxu0 0
        %906 = vmatpush1.bf16.xpose.msra.mxu0 0
        %907 = vmatprep.subr.bf16.mxu0 0
        %908 = vmatpush1.bf16.xpose.msra.mxu0 0
        %909 = vmatprep.subr.bf16.mxu0 0
        %910 = vmatpush1.bf16.xpose.msra.mxu0 0
        %911 = vmatprep.subr.bf16.mxu0 0
        %912 = vmatpush1.bf16.xpose.msra.mxu0 0
        %913 = vmatprep.subr.bf16.mxu0 0
        %914 = vmatpush1.bf16.xpose.msra.mxu0 0
        %915 = vmatprep.subr.bf16.mxu0 0
        %916 = vmatpush1.bf16.xpose.msra.mxu0 0
        %917 = vmatprep.subr.bf16.mxu0 0
        %918 = vmatpush1.bf16.xpose.msra.mxu0 0
        %919 = vmatprep.subr.bf16.mxu0 0
        %920 = vmatpush1.bf16.xpose.msra.mxu0 0
        %921 = vmatprep.subr.bf16.mxu0 0
        %922 = vmatpush1.bf16.xpose.msra.mxu0 0
        %923 = vmatprep.subr.bf16.mxu0 0
        %924 = vmatpush1.bf16.xpose.msra.mxu0 0
        %925 = vmatprep.subr.bf16.mxu0 0
        %926 = vmatpush1.bf16.xpose.msra.mxu0 0
        %927 = vmatprep.subr.bf16.mxu0 0
        %928 = vmatpush1.bf16.xpose.msra.mxu0 0
        %929 = vmatprep.subr.bf16.mxu0 0
        %930 = vmatpush1.bf16.xpose.msra.mxu0 0
        %931 = vmatprep.subr.bf16.mxu0 0
        %932 = vmatpush1.bf16.xpose.msra.mxu0 0
        %933 = vmatprep.mubr.bf16.mxu0 0
        %934 = vmatmul.mubr.bf16.gmra.mrb[0].mxu0 %v896
        %v935 = vpop.f32.mrb[0].mxu0
        %v936 = vadd.f32 0.0, %v935
        %v937 = vpop.f32.mrb[0].mxu0
        %v938 = vpop.f32.mrb[0].mxu0
        %v939 = vpop.f32.mrb[0].mxu0
        %940 = vdwg.mxu0
        %v941 = vsel %vm662, %v936, -inf
        %942 = vmax.xlane.f32.xlu0 %v941
        %v943 = vpop.xlane.xlu0 %942
        %v944 = vsub.f32 %v936, %v943
        %v945 = vmul.f32 %v944, 1.442695
        %v946 = vpow.pop %v945
        %v947 = vsel %vm662, %v946, 0.0
        %948 = vadd.xlane.f32.xlu0 %v947
        %v949 = vpop.xlane.xlu0 %948
        %v950 = vrcp.pop %v949
        %v951 = vmul.f32 %v946, %v950
        %s952 = scalar_lea.vmem %s428, 16 [#allocation12]
        %953 = vst.msk [vmem:[%s952] sm:$0xff] %vm662, %v951
        %v954 = vpack.c.bf16 %v951, %v951
        %955 = vrot.lane.b32.xlu0 %v661, 112
        %v956 = vpop.permute.xlu0 %955
        %v958 = vsel %vm662, %v954, 0
        %v961 = vsel %vm725, %v956, 0
        %963 = vmatprep.subr.bf16.mxu0 0
        %964 = vmatpush1.bf16.msra.mxu0 %v961
        %965 = vmatprep.subr.bf16.mxu0 0
        %966 = vmatpush1.bf16.msra.mxu0 0
        %967 = vmatprep.subr.bf16.mxu0 0
        %968 = vmatpush1.bf16.msra.mxu0 0
        %969 = vmatprep.subr.bf16.mxu0 0
        %970 = vmatpush1.bf16.msra.mxu0 0
        %971 = vmatprep.subr.bf16.mxu0 0
        %972 = vmatpush1.bf16.msra.mxu0 0
        %973 = vmatprep.subr.bf16.mxu0 0
        %974 = vmatpush1.bf16.msra.mxu0 0
        %975 = vmatprep.subr.bf16.mxu0 0
        %976 = vmatpush1.bf16.msra.mxu0 0
        %977 = vmatprep.subr.bf16.mxu0 0
        %978 = vmatpush1.bf16.msra.mxu0 0
        %979 = vmatprep.subr.bf16.mxu0 0
        %980 = vmatpush1.bf16.msra.mxu0 0
        %981 = vmatprep.subr.bf16.mxu0 0
        %982 = vmatpush1.bf16.msra.mxu0 0
        %983 = vmatprep.subr.bf16.mxu0 0
        %984 = vmatpush1.bf16.msra.mxu0 0
        %985 = vmatprep.subr.bf16.mxu0 0
        %986 = vmatpush1.bf16.msra.mxu0 0
        %987 = vmatprep.subr.bf16.mxu0 0
        %988 = vmatpush1.bf16.msra.mxu0 0
        %989 = vmatprep.subr.bf16.mxu0 0
        %990 = vmatpush1.bf16.msra.mxu0 0
        %991 = vmatprep.subr.bf16.mxu0 0
        %992 = vmatpush1.bf16.msra.mxu0 0
        %993 = vmatprep.subr.bf16.mxu0 0
        %994 = vmatpush1.bf16.msra.mxu0 0
        %995 = vmatprep.mubr.bf16.mxu0 0
        %996 = vmatmul.mubr.bf16.gmra.mrb[0].mxu0 %v958
        %v997 = vpop.f32.mrb[0].mxu0
        %v998 = vadd.f32 0.0, %v997
        %v999 = vpop.f32.mrb[0].mxu0
        %v1000 = vpop.f32.mrb[0].mxu0
        %v1001 = vpop.f32.mrb[0].mxu0
        %1002 = vdwg.mxu0
        %1004 = vrot.lane.b32.xlu0 %v998, 16
        %v1005 = vpop.permute.xlu0 %1004
        %vm1007 = vcmask 195712
        %1008 = vst.msk [vmem:[#allocation2] sm:$0xff] %vm1007, %v1005
        %1009 = vrot.lane.b32.xlu0 %v659, 104
        %v1010 = vpop.permute.xlu0 %1009
        %1011 = vrot.lane.b32.xlu0 %v660, 104
        %v1012 = vpop.permute.xlu0 %1011
        %v1014 = vsel %vm662, %v1010, 0
        %v1017 = vsel %vm662, %v1012, 0
        %1019 = vmatprep.subr.bf16.mxu0 0
        %1020 = vmatpush1.bf16.xpose.msra.mxu0 %v1017
        %1021 = vmatprep.subr.bf16.mxu0 0
        %1022 = vmatpush1.bf16.xpose.msra.mxu0 0
        %1023 = vmatprep.subr.bf16.mxu0 0
        %1024 = vmatpush1.bf16.xpose.msra.mxu0 0
        %1025 = vmatprep.subr.bf16.mxu0 0
        %1026 = vmatpush1.bf16.xpose.msra.mxu0 0
        %1027 = vmatprep.subr.bf16.mxu0 0
        %1028 = vmatpush1.bf16.xpose.msra.mxu0 0
        %1029 = vmatprep.subr.bf16.mxu0 0
        %1030 = vmatpush1.bf16.xpose.msra.mxu0 0
        %1031 = vmatprep.subr.bf16.mxu0 0
        %1032 = vmatpush1.bf16.xpose.msra.mxu0 0
        %1033 = vmatprep.subr.bf16.mxu0 0
        %1034 = vmatpush1.bf16.xpose.msra.mxu0 0
        %1035 = vmatprep.subr.bf16.mxu0 0
        %1036 = vmatpush1.bf16.xpose.msra.mxu0 0
        %1037 = vmatprep.subr.bf16.mxu0 0
        %1038 = vmatpush1.bf16.xpose.msra.mxu0 0
        %1039 = vmatprep.subr.bf16.mxu0 0
        %1040 = vmatpush1.bf16.xpose.msra.mxu0 0
        %1041 = vmatprep.subr.bf16.mxu0 0
        %1042 = vmatpush1.bf16.xpose.msra.mxu0 0
        %1043 = vmatprep.subr.bf16.mxu0 0
        %1044 = vmatpush1.bf16.xpose.msra.mxu0 0
        %1045 = vmatprep.subr.bf16.mxu0 0
        %1046 = vmatpush1.bf16.xpose.msra.mxu0 0
        %1047 = vmatprep.subr.bf16.mxu0 0
        %1048 = vmatpush1.bf16.xpose.msra.mxu0 0
        %1049 = vmatprep.subr.bf16.mxu0 0
        %1050 = vmatpush1.bf16.xpose.msra.mxu0 0
        %1051 = vmatprep.mubr.bf16.mxu0 0
        %1052 = vmatmul.mubr.bf16.gmra.mrb[0].mxu0 %v1014
        %v1053 = vpop.f32.mrb[0].mxu0
        %v1054 = vadd.f32 0.0, %v1053
        %v1055 = vpop.f32.mrb[0].mxu0
        %v1056 = vpop.f32.mrb[0].mxu0
        %v1057 = vpop.f32.mrb[0].mxu0
        %1058 = vdwg.mxu0
        %v1059 = vsel %vm662, %v1054, -inf
        %1060 = vmax.xlane.f32.xlu0 %v1059
        %v1061 = vpop.xlane.xlu0 %1060
        %v1062 = vsub.f32 %v1054, %v1061
        %v1063 = vmul.f32 %v1062, 1.442695
        %v1064 = vpow.pop %v1063
        %v1065 = vsel %vm662, %v1064, 0.0
        %1066 = vadd.xlane.f32.xlu0 %v1065
        %v1067 = vpop.xlane.xlu0 %1066
        %v1068 = vrcp.pop %v1067
        %v1069 = vmul.f32 %v1064, %v1068
        %s1070 = scalar_lea.vmem %s428, 24 [#allocation12]
        %1071 = vst.msk [vmem:[%s1070] sm:$0xff] %vm662, %v1069
        %v1072 = vpack.c.bf16 %v1069, %v1069
        %1073 = vrot.lane.b32.xlu0 %v661, 104
        %v1074 = vpop.permute.xlu0 %1073
        %v1076 = vsel %vm662, %v1072, 0
        %v1079 = vsel %vm725, %v1074, 0
        %1081 = vmatprep.subr.bf16.mxu0 0
        %1082 = vmatpush1.bf16.msra.mxu0 %v1079
        %1083 = vmatprep.subr.bf16.mxu0 0
        %1084 = vmatpush1.bf16.msra.mxu0 0
        %1085 = vmatprep.subr.bf16.mxu0 0
        %1086 = vmatpush1.bf16.msra.mxu0 0
        %1087 = vmatprep.subr.bf16.mxu0 0
        %1088 = vmatpush1.bf16.msra.mxu0 0
        %1089 = vmatprep.subr.bf16.mxu0 0
        %1090 = vmatpush1.bf16.msra.mxu0 0
        %1091 = vmatprep.subr.bf16.mxu0 0
        %1092 = vmatpush1.bf16.msra.mxu0 0
        %1093 = vmatprep.subr.bf16.mxu0 0
        %1094 = vmatpush1.bf16.msra.mxu0 0
        %1095 = vmatprep.subr.bf16.mxu0 0
        %1096 = vmatpush1.bf16.msra.mxu0 0
        %1097 = vmatprep.subr.bf16.mxu0 0
        %1098 = vmatpush1.bf16.msra.mxu0 0
        %1099 = vmatprep.subr.bf16.mxu0 0
        %1100 = vmatpush1.bf16.msra.mxu0 0
        %1101 = vmatprep.subr.bf16.mxu0 0
        %1102 = vmatpush1.bf16.msra.mxu0 0
        %1103 = vmatprep.subr.bf16.mxu0 0
        %1104 = vmatpush1.bf16.msra.mxu0 0
        %1105 = vmatprep.subr.bf16.mxu0 0
        %1106 = vmatpush1.bf16.msra.mxu0 0
        %1107 = vmatprep.subr.bf16.mxu0 0
        %1108 = vmatpush1.bf16.msra.mxu0 0
        %1109 = vmatprep.subr.bf16.mxu0 0
        %1110 = vmatpush1.bf16.msra.mxu0 0
        %1111 = vmatprep.subr.bf16.mxu0 0
        %1112 = vmatpush1.bf16.msra.mxu0 0
        %1113 = vmatprep.mubr.bf16.mxu0 0
        %1114 = vmatmul.mubr.bf16.gmra.mrb[0].mxu0 %v1076
        %v1115 = vpop.f32.mrb[0].mxu0
        %v1116 = vadd.f32 0.0, %v1115
        %v1117 = vpop.f32.mrb[0].mxu0
        %v1118 = vpop.f32.mrb[0].mxu0
        %v1119 = vpop.f32.mrb[0].mxu0
        %1120 = vdwg.mxu0
        %1122 = vrot.lane.b32.xlu0 %v1116, 24
        %v1123 = vpop.permute.xlu0 %1122
        %vm1125 = vcmask 261312
        %1126 = vst.msk [vmem:[#allocation2] sm:$0xff] %vm1125, %v1123
        %v1127 = vld [vmem:[#allocation2] sm:$0xff]
        %v1128 = vpack.c.bf16 %v1127, %v1127
        %v1129 = vld [vmem:[#allocation9] sm:$0xf]
        %v1130 = vld [vmem:[#allocation9 + $0x4] sm:$0xf]
        %v1131 = vld [vmem:[#allocation9 + $0x8] sm:$0xf]
        %v1132 = vld [vmem:[#allocation9 + $0xc] sm:$0xf]
        %v1133 = vlaneseq
        %v1134 = vshrl.u32 %v1133, 7
        %v1135 = vsub.s32 3, %v1134
        %v1136 = vrot.slane %v438, %v1135
        %v1141 = vunpack.c.l.b16 %v1129
        %v1142 = vunpack.c.l.b16 %v1130
        %v1143 = vunpack.c.l.b16 %v1131
        %v1144 = vunpack.c.l.b16 %v1132
        %v1145 = vpack.c.b16 %v1142, %v1141
        %v1146 = vpack.c.b16 %v1144, %v1143
        %v1150 = vsel %vm470, %v1128, 0
        %1152 = vmatprep.subr.bf16.mxu0 0
        %1153 = vmatpush1.bf16.msra.mxu0 %v1145
        %1154 = vmatprep.subr.bf16.mxu0 0
        %1155 = vmatpush1.bf16.msra.mxu0 %v1146
        %1156 = vmatprep.subr.bf16.mxu0 0
        %1157 = vmatpush1.bf16.msra.mxu0 0
        %1158 = vmatprep.subr.bf16.mxu0 0
        %1159 = vmatpush1.bf16.msra.mxu0 0
        %1160 = vmatprep.subr.bf16.mxu0 0
        %1161 = vmatpush1.bf16.msra.mxu0 0
        %1162 = vmatprep.subr.bf16.mxu0 0
        %1163 = vmatpush1.bf16.msra.mxu0 0
        %1164 = vmatprep.subr.bf16.mxu0 0
        %1165 = vmatpush1.bf16.msra.mxu0 0
        %1166 = vmatprep.subr.bf16.mxu0 0
        %1167 = vmatpush1.bf16.msra.mxu0 0
        %1168 = vmatprep.subr.bf16.mxu0 0
        %1169 = vmatpush1.bf16.msra.mxu0 0
        %1170 = vmatprep.subr.bf16.mxu0 0
        %1171 = vmatpush1.bf16.msra.mxu0 0
        %1172 = vmatprep.subr.bf16.mxu0 0
        %1173 = vmatpush1.bf16.msra.mxu0 0
        %1174 = vmatprep.subr.bf16.mxu0 0
        %1175 = vmatpush1.bf16.msra.mxu0 0
        %1176 = vmatprep.subr.bf16.mxu0 0
        %1177 = vmatpush1.bf16.msra.mxu0 0
        %1178 = vmatprep.subr.bf16.mxu0 0
        %1179 = vmatpush1.bf16.msra.mxu0 0
        %1180 = vmatprep.subr.bf16.mxu0 0
        %1181 = vmatpush1.bf16.msra.mxu0 0
        %1182 = vmatprep.subr.bf16.mxu0 0
        %1183 = vmatpush1.bf16.msra.mxu0 0
        %1184 = vmatprep.mubr.bf16.mxu0 0
        %1185 = vmatmul.mubr.bf16.gmra.mrb[0].mxu0 %v1150
        %v1186 = vpop.f32.mrb[0].mxu0
        %v1187 = vadd.f32 %v1136, %v1186
        %v1188 = vpop.f32.mrb[0].mxu0
        %v1189 = vpop.f32.mrb[0].mxu0
        %v1190 = vpop.f32.mrb[0].mxu0
        %1191 = vdwg.mxu0
        %1192 = vst.msk [vmem:[%s421] sm:$0xff] %vm470, %v1187
        %s1193 = sand.u32 %s223, 1
        %s1194 = scalar_lea.sflag [#allocation5], %s1193
        %s1195 = sand.u32 %s223, 1
        %s1196 = smul.addr %s1195, 8
        %s1197 = scalar_lea.vmem [#allocation11], %s1196
        %s1198 = sand.u32 %s249, 1
        %s1199 = scalar_lea.sflag [#allocation13], %s1198
        %s1200 = sand.u32 %s249, 1
        %s1201 = smul.addr %s1200, 32
        %s1202 = scalar_lea.vmem [#allocation12], %s1201
        // Predicated region
        $region69: #{tpu_custom_call.1} parent=51 // pred_check
          %p1203 = pneg %p233
        $region70: #{tpu_custom_call.1} parent=51 // pred_check_branch
          %1205 = sbr.rel (%p1203) target = $region72
        $region71: #{tpu_custom_call.1} parent=51 // pred_region
          %s1207 = ssub.s32 128, 128
          %1208 = vsyncadd %s1194, %s1207
          %s1209 = smul.addr %s32, 128
          %s1210 = scalar_lea.hbm %s8, %s1209
          %s1212 = sshll.u32 %s1197, 4
          %s1213 = int_to_ptr.vmem [resolvable:$true] %s1212
          %1215 = dma.vmem_to_hbm [thread:$0]  %s1213, 128, %s1210, %s1194
        $region72: #{tpu_custom_call.1} parent=51 // pred_fallthru
          _
        // Predicated region
        $region73: #{tpu_custom_call.1} parent=51 // pred_check
          %p1216 = pneg %p259
        $region74: #{tpu_custom_call.1} parent=51 // pred_check_branch
          %1218 = sbr.rel (%p1216) target = $region76
        $region75: #{tpu_custom_call.1} parent=51 // pred_region
          %s1220 = ssub.s32 512, 512
          %1221 = vsyncadd %s1199, %s1220
          %s1222 = smul.addr %s32, 4
          %s1223 = smul.addr %s1222, 128
          %s1224 = scalar_lea.hbm %s9, %s1223
          %s1225 = sshll.u32 %s1202, 4
          %s1226 = int_to_ptr.vmem [resolvable:$true] %s1225
          %1231 = dma.vmem_to_hbm [thread:$0]  %s1226, 512, %s1224, %s1199, 128, 128, 8
        $region76: #{tpu_custom_call.1} parent=51 // pred_fallthru
          _
      $region52: #{tpu_custom_call.1} parent=5 // pred_fallthru
        _
      %p1232 = scmp.le.s32.totalorder 2, %s27
      // Predicated region
      $region77: #{tpu_custom_call.1} parent=5 // pred_check
        %p1233 = pneg %p1232
      $region78: #{tpu_custom_call.1} parent=5 // pred_check_branch
        %1235 = sbr.rel (%p1233) target = $region80
      $region79: #{tpu_custom_call.1} parent=5 // pred_region
        %s1236 = ssub.s32 %s27, 2
        // Predicated region
        $region81: #{tpu_custom_call.1} parent=79 // pred_check
          %p1237 = pneg %p239
        $region82: #{tpu_custom_call.1} parent=79 // pred_check_branch
          %1239 = sbr.rel (%p1237) target = $region84
        $region83: #{tpu_custom_call.1} parent=79 // pred_region
          %s1240 = sand.u32 %s224, 1
          %s1241 = scalar_lea.sflag [#allocation5], %s1240
          %s1242 = sand.u32 %s224, 1
          %s1243 = smul.addr %s1242, 8
          %s1244 = scalar_lea.vmem [#allocation11], %s1243
          %1245 = dma.done %s1241, 128
        $region84: #{tpu_custom_call.1} parent=79 // pred_fallthru
          _
        // Predicated region
        $region85: #{tpu_custom_call.1} parent=79 // pred_check
          %p1246 = pneg %p265
        $region86: #{tpu_custom_call.1} parent=79 // pred_check_branch
          %1248 = sbr.rel (%p1246) target = $region88
        $region87: #{tpu_custom_call.1} parent=79 // pred_region
          %s1249 = sand.u32 %s250, 1
          %s1250 = scalar_lea.sflag [#allocation13], %s1249
          %s1251 = sand.u32 %s250, 1
          %s1252 = smul.addr %s1251, 32
          %s1253 = scalar_lea.vmem [#allocation12], %s1252
          %1254 = dma.done %s1250, 512
        $region88: #{tpu_custom_call.1} parent=79 // pred_fallthru
          _
      $region80: #{tpu_custom_call.1} parent=5 // pred_fallthru
        _
    $region6: #{tpu_custom_call.1} parent=1 // loop_footer
      %s31 = sadd.s32 1, %s27
    $region7: #{tpu_custom_call.1} parent=1 // loop_footer_branch
      %26 = sbr.rel target = $region3
    $region8: #{tpu_custom_call.1} parent=1 // loop_exit
      _
    %1255 = vsyncpa [#allocation4], 1
    %s1256 = scalar_lea.sflag [#allocation4], 1
    %1257 = vsyncpa %s1256, 1
    %1258 = vsyncpa [#allocation7], 1
    %1259 = vsyncpa [#allocation10], 1
    %1260 = vsyncpa [#allocation5], 1
    %s1261 = scalar_lea.sflag [#allocation5], 1
    %1262 = vsyncpa %s1261, 1
    %1263 = vsyncpa [#allocation13], 1
    %s1264 = scalar_lea.sflag [#allocation13], 1
    %1265 = vsyncpa %s1264, 1

</llo_original>
